<compile_context>
chip_gen: v5e
topology: v5e:2x2
jax: 0.10.0
libtpu: 0.0.40
codegen_flags: <defaults>
</compile_context>

<pallas_src>
import math
import functools

import jax
import jax.numpy as jnp
from jax import lax
from jax.experimental import pallas as pl
from jax.experimental.pallas import tpu as pltpu

_VMEM = pl.BlockSpec(memory_space=pltpu.MemorySpace.VMEM)
_SMEM = pl.BlockSpec(memory_space=pltpu.MemorySpace.SMEM)


# ----------------------------------------------------------------------------
# The fused LTBS kernel
# ----------------------------------------------------------------------------

def _ltbs_kernel(x_ref, code_ref, psh_ref, esh_ref, melt_ref, mask_ref,
                 wxe_ref, bxe_ref, ling_ref, pcw_ref, pcb_ref, ecw_ref, ecb_ref,
                 wfm_ref, bfm_ref,
                 heads_ref, mel_ref, loss_ref, *, d_att, c_code, eps):
    B, T, _ = x_ref.shape

    # --- video-encoder stub + the three predictor heads in ONE widened MXU pass:
    #     [enc | heads] = x @ [We | We@Wh] + [be | be@Wh + bh]
    eh = jnp.einsum("btk,kn->btn", x_ref[...], wxe_ref[...],
                    preferred_element_type=jnp.float32) + bxe_ref[...]
    enc = eh[..., :d_att]                                    # (B, T, d_att)  f32
    heads = eh[..., d_att:]                                  # (B, T, c_code+2) f32
    heads_ref[...] = heads

    # --- linguistic embedding lookup as a one-hot matmul (gather-free)
    n_emb = ling_ref.shape[0]                                # c_code + 1 (row 0 = pad)
    code = code_ref[...][..., None]                          # (B, T, 1) int32
    iota = lax.broadcasted_iota(jnp.int32, (B, T, n_emb), 2)
    onehot = iota == code                                    # bool (B, T, n_emb)
    code_emb = jnp.einsum("bte,ec->btc", onehot.astype(jnp.float32), ling_ref[...],
                          preferred_element_type=jnp.float32)

    # --- Conv1d(1 -> C, k=3, pad=1) as three f32 VPU FMAs on pre-shifted taps.
    #     Centre tap doubles as the pitch / energy L1 target.
    def conv3(sh_ref, w, b):
        x0 = sh_ref[0][:, :, None]
        x1 = sh_ref[1][:, :, None]
        x2 = sh_ref[2][:, :, None]
        return x0 * w[0:1, :] + x1 * w[1:2, :] + x2 * w[2:3, :] + b, x1

    p_emb, p_tgt = conv3(psh_ref, pcw_ref[...], pcb_ref[...])   # (B,T,Dp), (B,T,1)
    e_emb, e_tgt = conv3(esh_ref, ecw_ref[...], ecb_ref[...])   # (B,T,De), (B,T,1)

    # --- fusion + mel-decoder stub folded into a single K=64 matmul on the
    #     lane-concatenated slab (valid while the decoder stub is pointwise affine).
    slab = jnp.concatenate([enc, code_emb, p_emb, e_emb],
                           axis=-1).astype(jnp.bfloat16)        # (B, T, 64)
    mel_t = jnp.einsum("btk,kn->btn", slab, wfm_ref[...],
                       preferred_element_type=jnp.float32) + bfm_ref[...]  # (B,T,n_mel)

    # --- torch.repeat_interleave(.., 4, dim=time) written as 4x LANE tiling:
    #     (B, T, 4*n_mel) row-major == (B, 4T, n_mel); wrapper reshape is free.
    mel_ref[...] = jnp.concatenate([mel_t, mel_t, mel_t, mel_t], axis=-1)

    # ------------------------------- losses ---------------------------------
    logits = heads[..., :c_code]
    pitch_pred = heads[..., c_code:c_code + 1]
    energy_pred = heads[..., c_code + 1:c_code + 2]

    # label-smoothed cross-entropy, ignore_index == -1 (i.e. raw code value 0)
    m = jnp.max(logits, axis=-1, keepdims=True)
    s = logits - m
    logp = s - jnp.log(jnp.sum(jnp.exp(s), axis=-1, keepdims=True))
    nll = -jnp.sum(jnp.where(onehot[..., 1:], logp, 0.0), axis=-1, keepdims=True)
    smooth = -jnp.sum(logp, axis=-1, keepdims=True) / float(c_code)
    per_tok = (1.0 - eps) * nll + eps * smooth
    valid = (code != 0).astype(jnp.float32)                  # (B, T, 1)
    n_valid = jnp.maximum(jnp.sum(valid), 1.0)               # guard: no NaN if all ignored
    ce = jnp.sum(per_tok * valid) / n_valid

    # pitch / energy L1 (unmasked mean — nn.L1Loss default, as in the reference)
    p_l1 = jnp.mean(jnp.abs(pitch_pred - p_tgt))
    e_l1 = jnp.mean(jnp.abs(energy_pred - e_tgt))

    # mel L1 + post-net MLE from the UN-repeated prediction against the native-layout
    # target; the 4x-smaller prediction is the one that gets transposed (XLU, cheap).
    tgt4 = melt_ref[...]                                     # (B, n_mel, T, 4)
    pred_c = jnp.transpose(mel_t, (0, 2, 1))[..., None]      # (B, n_mel, T, 1)
    n_mel = tgt4.shape[1]
    mel_l1 = jnp.sum(jnp.abs(pred_c - tgt4)) / float(B * T * n_mel * 4)

    # post-net stub = masked identity flow: z = mask * mel_target, logs = 0, logdet = 0
    mask = mask_ref[...]                                     # (B, T)
    z = tgt4 * mask[:, None, :, None]
    denom = float(4 * n_mel) * jnp.sum(mask)                 # == sum(ones_like(z) * mel_mask)
    post = 0.5 * jnp.sum((z - pred_c) ** 2) / denom + 0.5 * math.log(2.0 * math.pi)

    loss_ref[0, 0] = ce
    loss_ref[0, 1] = p_l1
    loss_ref[0, 2] = e_l1
    loss_ref[0, 3] = ce + p_l1 + e_l1                        # var_loss
    loss_ref[0, 4] = mel_l1
    loss_ref[0, 5] = post


# ----------------------------------------------------------------------------
# Parameters (deterministic, synthetic)
# ----------------------------------------------------------------------------

CFG = dict(
    d_vid=16,       # stub video-frame feature dim
    d_att=32,       # cfg.video_encoder.attention_dim
    c_code=8,       # cfg.variance_decoder.linguistic.output_channels
    d_ling=16,      # cfg.variance_decoder.linguistic_dim
    d_pitch=8,      # cfg.variance_decoder.pitch_dim
    d_energy=8,     # cfg.variance_decoder.energy_dim
    n_mel=16,       # mel channels
    n_sqz=2,        # cfg.post_net.n_sqz
)


def init_params(key, cfg):
    ks = jax.random.split(key, 16)
    n = lambda k, s: 0.1 * jax.random.normal(k, s, jnp.float32)
    return dict(
        w_enc=n(ks[0], (cfg["d_vid"], cfg["d_att"])), b_enc=n(ks[1], (cfg["d_att"],)),
        w_ling=n(ks[2], (cfg["d_att"], cfg["c_code"])), b_ling=n(ks[3], (cfg["c_code"],)),
        w_pitch=n(ks[4], (cfg["d_att"], 1)), b_pitch=n(ks[5], (1,)),
        w_energy=n(ks[6], (cfg["d_att"], 1)), b_energy=n(ks[7], (1,)),
        w_mel=n(ks[8], (cfg["d_att"], cfg["n_mel"])), b_mel=n(ks[9], (cfg["n_mel"],)),
        ling_table=n(ks[10], (cfg["c_code"] + 1, cfg["d_ling"])),
        pitch_conv_w=n(ks[11], (3, cfg["d_pitch"])),      # torch (C,1,3) transposed
        pitch_conv_b=n(ks[12], (1, cfg["d_pitch"])),
        energy_conv_w=n(ks[13], (3, cfg["d_energy"])),
        energy_conv_b=n(ks[14], (1, cfg["d_energy"])),
        w_fusion=n(ks[15],
                   (cfg["d_att"] + cfg["d_ling"] + cfg["d_pitch"] + cfg["d_energy"],
                    cfg["d_att"])),
        b_fusion=jnp.zeros((cfg["d_att"],), jnp.float32),
    )


def prepare_params(p, cfg):
    """One-time layout / precision plumbing + affine folds (exact while the encoder
    and mel-decoder stubs are affine): heads folded into the encoder matmul, the
    fusion Linear folded into the mel-decoder projection; MXU weights pre-cast bf16."""
    w_heads = jnp.concatenate([p["w_ling"], p["w_pitch"], p["w_energy"]], axis=1)
    b_heads = jnp.concatenate([p["b_ling"], p["b_pitch"], p["b_energy"]])
    w_xeh = jnp.concatenate([p["w_enc"], p["w_enc"] @ w_heads], axis=1)
    b_xeh = jnp.concatenate([p["b_enc"], p["b_enc"] @ w_heads + b_heads]).reshape(1, -1)
    w_fm = p["w_fusion"] @ p["w_mel"]
    b_fm = (p["b_fusion"] @ p["w_mel"] + p["b_mel"]).reshape(1, -1)
    return dict(
        w_xeh=w_xeh.astype(jnp.bfloat16), b_xeh=b_xeh,
        ling_table=p["ling_table"],
        pitch_conv_w=p["pitch_conv_w"], pitch_conv_b=p["pitch_conv_b"],
        energy_conv_w=p["energy_conv_w"], energy_conv_b=p["energy_conv_b"],
        w_fusion_mel=w_fm.astype(jnp.bfloat16), b_fusion_mel=b_fm,
    )


# ----------------------------------------------------------------------------
# LTBS forward (training path) — one pallas_call, fully jittable, no host syncs
# ----------------------------------------------------------------------------

def ltbs_forward(kp, cfg, x, x_len, spks_id, code, pitch, energy, mel,
                 p_control=1.0, e_control=1.0):
    del spks_id, p_control, e_control          # unused on the training path / stub encoder
    B, T, _ = x.shape
    c_code, n_mel = cfg["c_code"], cfg["n_mel"]
    n_heads = c_code + 2

    # Static 4*T replaces int(max(x_len))*4 // n_sqz * n_sqz: with T == max(x_len)
    # and n_sqz == 2 the trim is a no-op, and the device->host sync disappears.
    mask = (jnp.arange(T)[None, :] < x_len[:, None]).astype(jnp.float32)   # (B, T)

    # three shifted taps of the k=3 / pad=1 convs (centre tap == the L1 target)
    def taps(sig):
        pad = jnp.pad(sig.astype(jnp.float32), ((0, 0), (1, 1)))
        return jnp.stack([pad[:, 0:T], pad[:, 1:T + 1], pad[:, 2:T + 2]], axis=0)

    # mel target stays in its native (B, n_mel, 4T) layout; the (T, 4) split is a
    # free row-major reshape — no transpose of the largest tensor anywhere.
    mel_tgt4 = mel.astype(jnp.float32).reshape(B, n_mel, T, 4)

    heads, mel_tiled, L = pl.pallas_call(
        functools.partial(_ltbs_kernel, d_att=cfg["d_att"], c_code=c_code, eps=0.1),
        out_shape=(jax.ShapeDtypeStruct((B, T, n_heads), jnp.float32),
                   jax.ShapeDtypeStruct((B, T, 4 * n_mel), jnp.float32),
                   jax.ShapeDtypeStruct((1, 6), jnp.float32)),
        in_specs=[_VMEM] * 15,
        out_specs=(_VMEM, _VMEM, _SMEM),
        compiler_params=pltpu.CompilerParams(vmem_limit_bytes=32 * 1024 * 1024),
    )(x.astype(jnp.bfloat16), code.astype(jnp.int32), taps(pitch), taps(energy),
      mel_tgt4, mask,
      kp["w_xeh"], kp["b_xeh"], kp["ling_table"],
      kp["pitch_conv_w"], kp["pitch_conv_b"],
      kp["energy_conv_w"], kp["energy_conv_b"],
      kp["w_fusion_mel"], kp["b_fusion_mel"])

    code_logit = heads[..., :c_code]                         # (B, T, c_code)
    pitch_pred = heads[..., c_code]                          # (B, T)
    energy_pred = heads[..., c_code + 1]                     # (B, T)
    # (B, T, 4*n_mel) -> (B, 4T, n_mel) is a free row-major reshape and equals
    # torch.repeat_interleave(mel_T, 4, dim=1) of the per-frame decoder output.
    mel_outputs = mel_tiled.reshape(B, 4 * T, n_mel)

    code_ce_loss, pitch_l1_loss, energy_l1_loss = L[0, 0], L[0, 1], L[0, 2]
    var_loss, mel_loss, post_loss = L[0, 3], L[0, 4], L[0, 5]
    return ((mel_loss, var_loss, post_loss,
             (code_ce_loss, pitch_l1_loss, energy_l1_loss)),
            (mel_outputs, code_logit, pitch_pred, energy_pred))


# ----------------------------------------------------------------------------
# Driver
# ----------------------------------------------------------------------------

if __name__ == "__main__":
    cfg = CFG
    B, T = 2, 8
    key = jax.random.PRNGKey(0)
    k = jax.random.split(key, 5)

    x = jax.random.normal(k[0], (B, T, cfg["d_vid"]), jnp.float32)
    x_len = jnp.full((B,), T, jnp.int32)
    spks_id = jnp.zeros((B,), jnp.int32)
    code = jax.random.randint(k[1], (B, T), 1, cfg["c_code"] + 1, dtype=jnp.int32)
    pitch = jax.random.normal(k[2], (B, T), jnp.float32)
    energy = jax.random.normal(k[3], (B, T), jnp.float32)
    mel = jax.random.normal(k[4], (B, cfg["n_mel"], 4 * T), jnp.float32)

    params = prepare_params(init_params(jax.random.PRNGKey(42), cfg), cfg)

    fwd = jax.jit(lambda p, *args: ltbs_forward(p, cfg, *args))
    losses, outputs = fwd(params, x, x_len, spks_id, code, pitch, energy, mel)
    jax.block_until_ready(losses)
    jax.block_until_ready(outputs)
    print("KERNEL_OK")
</pallas_src>

<mosaic_0001>
module attributes {stable_mosaic.version = 11 : i64} {
  func.func @_ltbs_kernel(%arg0: memref<2x8x16xbf16, #tpu.memory_space<vmem>>, %arg1: memref<2x8xi32, #tpu.memory_space<vmem>>, %arg2: memref<3x2x8xf32, #tpu.memory_space<vmem>>, %arg3: memref<3x2x8xf32, #tpu.memory_space<vmem>>, %arg4: memref<2x16x8x4xf32, #tpu.memory_space<vmem>>, %arg5: memref<2x8xf32, #tpu.memory_space<vmem>>, %arg6: memref<16x42xbf16, #tpu.memory_space<vmem>>, %arg7: memref<1x42xf32, #tpu.memory_space<vmem>>, %arg8: memref<9x16xf32, #tpu.memory_space<vmem>>, %arg9: memref<3x8xf32, #tpu.memory_space<vmem>>, %arg10: memref<1x8xf32, #tpu.memory_space<vmem>>, %arg11: memref<3x8xf32, #tpu.memory_space<vmem>>, %arg12: memref<1x8xf32, #tpu.memory_space<vmem>>, %arg13: memref<64x16xbf16, #tpu.memory_space<vmem>>, %arg14: memref<1x16xf32, #tpu.memory_space<vmem>>, %arg15: memref<2x8x10xf32, #tpu.memory_space<vmem>>, %arg16: memref<2x8x64xf32, #tpu.memory_space<vmem>>, %arg17: memref<1x6xf32, #tpu.memory_space<smem>>) attributes {dimension_semantics = [], scalar_prefetch = 0 : i64, scratch_operands = 0 : i64, tpu.core_type = #tpu.core_type<tc>} {
    %c0 = arith.constant 0 : index
    %c0_0 = arith.constant 0 : index
    %c0_1 = arith.constant 0 : index
    %0 = vector.load %arg0[%c0, %c0_0, %c0_1] : memref<2x8x16xbf16, #tpu.memory_space<vmem>>, vector<2x8x16xbf16>
    %c0_2 = arith.constant 0 : index
    %c0_3 = arith.constant 0 : index
    %1 = vector.load %arg6[%c0_2, %c0_3] : memref<16x42xbf16, #tpu.memory_space<vmem>>, vector<16x42xbf16>
    "tpu.trace_start"() <{level = 10 : i32, message = "btk,kn->btn"}> : () -> ()
    %cst = arith.constant dense<0.000000e+00> : vector<2x8x42xf32>
    %2 = tpu.matmul %0, %1, %cst {dimension_numbers = #tpu.dot_dimension_numbers<[2], [0], [0, 1], [1], [0, 0, 0, 1, 1, 1], [], []>} : vector<2x8x16xbf16>, vector<16x42xbf16>, vector<2x8x42xf32> -> vector<2x8x42xf32>
    "tpu.trace_stop"() : () -> ()
    %c0_4 = arith.constant 0 : index
    %c0_5 = arith.constant 0 : index
    %3 = vector.load %arg7[%c0_4, %c0_5] : memref<1x42xf32, #tpu.memory_space<vmem>>, vector<1x42xf32>
    %4 = vector.shape_cast %3 : vector<1x42xf32> to vector<1x1x42xf32>
    %5 = vector.broadcast %4 : vector<1x1x42xf32> to vector<2x8x42xf32>
    %6 = arith.addf %2, %5 : vector<2x8x42xf32>
    %7 = vector.extract_strided_slice %6 {offsets = [0, 0, 0], sizes = [2, 8, 32], strides = [1, 1, 1]} : vector<2x8x42xf32> to vector<2x8x32xf32>
    %8 = vector.extract_strided_slice %6 {offsets = [0, 0, 32], sizes = [2, 8, 10], strides = [1, 1, 1]} : vector<2x8x42xf32> to vector<2x8x10xf32>
    %c0_6 = arith.constant 0 : index
    %c0_7 = arith.constant 0 : index
    %c0_8 = arith.constant 0 : index
    %9 = vector.load %arg15[%c0_6, %c0_7, %c0_8] : memref<2x8x10xf32, #tpu.memory_space<vmem>>, vector<2x8x10xf32>
    tpu.vector_store %arg15[%c0_6, %c0_7, %c0_8], %8 {strides = array<i32>} : memref<2x8x10xf32, #tpu.memory_space<vmem>>, vector<2x8x10xf32>,
    %c0_9 = arith.constant 0 : index
    %c0_10 = arith.constant 0 : index
    %10 = vector.load %arg1[%c0_9, %c0_10] : memref<2x8xi32, #tpu.memory_space<vmem>>, vector<2x8xi32>
    %11 = vector.shape_cast %10 : vector<2x8xi32> to vector<2x8x1xi32>
    %12 = tpu.iota {dimensions = array<i32: 2>} : vector<2x8x9xi32>
    %13 = vector.broadcast %11 : vector<2x8x1xi32> to vector<2x8x9xi32>
    %14 = arith.cmpi eq, %12, %13 : vector<2x8x9xi32>
    %15 = arith.extui %14 : vector<2x8x9xi1> to vector<2x8x9xi32>
    %16 = arith.sitofp %15 : vector<2x8x9xi32> to vector<2x8x9xf32>
    %c0_11 = arith.constant 0 : index
    %c0_12 = arith.constant 0 : index
    %17 = vector.load %arg8[%c0_11, %c0_12] : memref<9x16xf32, #tpu.memory_space<vmem>>, vector<9x16xf32>
    "tpu.trace_start"() <{level = 10 : i32, message = "bte,ec->btc"}> : () -> ()
    %cst_13 = arith.constant dense<0.000000e+00> : vector<2x8x16xf32>
    %18 = tpu.matmul %16, %17, %cst_13 {dimension_numbers = #tpu.dot_dimension_numbers<[2], [0], [0, 1], [1], [0, 0, 0, 1, 1, 1], [], []>} : vector<2x8x9xf32>, vector<9x16xf32>, vector<2x8x16xf32> -> vector<2x8x16xf32>
    "tpu.trace_stop"() : () -> ()
    %c0_14 = arith.constant 0 : index
    %c0_15 = arith.constant 0 : index
    %19 = vector.load %arg9[%c0_14, %c0_15] : memref<3x8xf32, #tpu.memory_space<vmem>>, vector<3x8xf32>
    %c0_16 = arith.constant 0 : index
    %c0_17 = arith.constant 0 : index
    %20 = vector.load %arg10[%c0_16, %c0_17] : memref<1x8xf32, #tpu.memory_space<vmem>>, vector<1x8xf32>
    %c0_18 = arith.constant 0 : index
    %c0_19 = arith.constant 0 : index
    %c0_20 = arith.constant 0 : index
    %21 = vector.load %arg2[%c0_18, %c0_19, %c0_20] : memref<3x2x8xf32, #tpu.memory_space<vmem>>, vector<1x2x8xf32>
    %22 = vector.shape_cast %21 : vector<1x2x8xf32> to vector<2x8xf32>
    %23 = vector.shape_cast %22 : vector<2x8xf32> to vector<2x8x1xf32>
    %c1 = arith.constant 1 : index
    %c0_21 = arith.constant 0 : index
    %c0_22 = arith.constant 0 : index
    %24 = vector.load %arg2[%c1, %c0_21, %c0_22] : memref<3x2x8xf32, #tpu.memory_space<vmem>>, vector<1x2x8xf32>
    %25 = vector.shape_cast %24 : vector<1x2x8xf32> to vector<2x8xf32>
    %26 = vector.shape_cast %25 : vector<2x8xf32> to vector<2x8x1xf32>
    %c2 = arith.constant 2 : index
    %c0_23 = arith.constant 0 : index
    %c0_24 = arith.constant 0 : index
    %27 = vector.load %arg2[%c2, %c0_23, %c0_24] : memref<3x2x8xf32, #tpu.memory_space<vmem>>, vector<1x2x8xf32>
    %28 = vector.shape_cast %27 : vector<1x2x8xf32> to vector<2x8xf32>
    %29 = vector.shape_cast %28 : vector<2x8xf32> to vector<2x8x1xf32>
    %30 = vector.extract_strided_slice %19 {offsets = [0, 0], sizes = [1, 8], strides = [1, 1]} : vector<3x8xf32> to vector<1x8xf32>
    %31 = vector.shape_cast %30 : vector<1x8xf32> to vector<1x1x8xf32>
    %32 = vector.broadcast %23 : vector<2x8x1xf32> to vector<2x8x8xf32>
    %33 = vector.broadcast %31 : vector<1x1x8xf32> to vector<2x8x8xf32>
    %34 = arith.mulf %32, %33 : vector<2x8x8xf32>
    %35 = vector.extract_strided_slice %19 {offsets = [1, 0], sizes = [1, 8], strides = [1, 1]} : vector<3x8xf32> to vector<1x8xf32>
    %36 = vector.shape_cast %35 : vector<1x8xf32> to vector<1x1x8xf32>
    %37 = vector.broadcast %26 : vector<2x8x1xf32> to vector<2x8x8xf32>
    %38 = vector.broadcast %36 : vector<1x1x8xf32> to vector<2x8x8xf32>
    %39 = arith.mulf %37, %38 : vector<2x8x8xf32>
    %40 = arith.addf %34, %39 : vector<2x8x8xf32>
    %41 = vector.extract_strided_slice %19 {offsets = [2, 0], sizes = [1, 8], strides = [1, 1]} : vector<3x8xf32> to vector<1x8xf32>
    %42 = vector.shape_cast %41 : vector<1x8xf32> to vector<1x1x8xf32>
    %43 = vector.broadcast %29 : vector<2x8x1xf32> to vector<2x8x8xf32>
    %44 = vector.broadcast %42 : vector<1x1x8xf32> to vector<2x8x8xf32>
    %45 = arith.mulf %43, %44 : vector<2x8x8xf32>
    %46 = arith.addf %40, %45 : vector<2x8x8xf32>
    %47 = vector.shape_cast %20 : vector<1x8xf32> to vector<1x1x8xf32>
    %48 = vector.broadcast %47 : vector<1x1x8xf32> to vector<2x8x8xf32>
    %49 = arith.addf %46, %48 : vector<2x8x8xf32>
    %c0_25 = arith.constant 0 : index
    %c0_26 = arith.constant 0 : index
    %50 = vector.load %arg11[%c0_25, %c0_26] : memref<3x8xf32, #tpu.memory_space<vmem>>, vector<3x8xf32>
    %c0_27 = arith.constant 0 : index
    %c0_28 = arith.constant 0 : index
    %51 = vector.load %arg12[%c0_27, %c0_28] : memref<1x8xf32, #tpu.memory_space<vmem>>, vector<1x8xf32>
    %c0_29 = arith.constant 0 : index
    %c0_30 = arith.constant 0 : index
    %c0_31 = arith.constant 0 : index
    %52 = vector.load %arg3[%c0_29, %c0_30, %c0_31] : memref<3x2x8xf32, #tpu.memory_space<vmem>>, vector<1x2x8xf32>
    %53 = vector.shape_cast %52 : vector<1x2x8xf32> to vector<2x8xf32>
    %54 = vector.shape_cast %53 : vector<2x8xf32> to vector<2x8x1xf32>
    %c1_32 = arith.constant 1 : index
    %c0_33 = arith.constant 0 : index
    %c0_34 = arith.constant 0 : index
    %55 = vector.load %arg3[%c1_32, %c0_33, %c0_34] : memref<3x2x8xf32, #tpu.memory_space<vmem>>, vector<1x2x8xf32>
    %56 = vector.shape_cast %55 : vector<1x2x8xf32> to vector<2x8xf32>
    %57 = vector.shape_cast %56 : vector<2x8xf32> to vector<2x8x1xf32>
    %c2_35 = arith.constant 2 : index
    %c0_36 = arith.constant 0 : index
    %c0_37 = arith.constant 0 : index
    %58 = vector.load %arg3[%c2_35, %c0_36, %c0_37] : memref<3x2x8xf32, #tpu.memory_space<vmem>>, vector<1x2x8xf32>
    %59 = vector.shape_cast %58 : vector<1x2x8xf32> to vector<2x8xf32>
    %60 = vector.shape_cast %59 : vector<2x8xf32> to vector<2x8x1xf32>
    %61 = vector.extract_strided_slice %50 {offsets = [0, 0], sizes = [1, 8], strides = [1, 1]} : vector<3x8xf32> to vector<1x8xf32>
    %62 = vector.shape_cast %61 : vector<1x8xf32> to vector<1x1x8xf32>
    %63 = vector.broadcast %54 : vector<2x8x1xf32> to vector<2x8x8xf32>
    %64 = vector.broadcast %62 : vector<1x1x8xf32> to vector<2x8x8xf32>
    %65 = arith.mulf %63, %64 : vector<2x8x8xf32>
    %66 = vector.extract_strided_slice %50 {offsets = [1, 0], sizes = [1, 8], strides = [1, 1]} : vector<3x8xf32> to vector<1x8xf32>
    %67 = vector.shape_cast %66 : vector<1x8xf32> to vector<1x1x8xf32>
    %68 = vector.broadcast %57 : vector<2x8x1xf32> to vector<2x8x8xf32>
    %69 = vector.broadcast %67 : vector<1x1x8xf32> to vector<2x8x8xf32>
    %70 = arith.mulf %68, %69 : vector<2x8x8xf32>
    %71 = arith.addf %65, %70 : vector<2x8x8xf32>
    %72 = vector.extract_strided_slice %50 {offsets = [2, 0], sizes = [1, 8], strides = [1, 1]} : vector<3x8xf32> to vector<1x8xf32>
    %73 = vector.shape_cast %72 : vector<1x8xf32> to vector<1x1x8xf32>
    %74 = vector.broadcast %60 : vector<2x8x1xf32> to vector<2x8x8xf32>
    %75 = vector.broadcast %73 : vector<1x1x8xf32> to vector<2x8x8xf32>
    %76 = arith.mulf %74, %75 : vector<2x8x8xf32>
    %77 = arith.addf %71, %76 : vector<2x8x8xf32>
    %78 = vector.shape_cast %51 : vector<1x8xf32> to vector<1x1x8xf32>
    %79 = vector.broadcast %78 : vector<1x1x8xf32> to vector<2x8x8xf32>
    %80 = arith.addf %77, %79 : vector<2x8x8xf32>
    %81 = tpu.concatenate %7, %18, %49, %80 in 2 : vector<2x8x32xf32>, vector<2x8x16xf32>, vector<2x8x8xf32>, vector<2x8x8xf32> -> vector<2x8x64xf32>
    %82 = arith.truncf %81 : vector<2x8x64xf32> to vector<2x8x64xbf16>
    %c0_38 = arith.constant 0 : index
    %c0_39 = arith.constant 0 : index
    %83 = vector.load %arg13[%c0_38, %c0_39] : memref<64x16xbf16, #tpu.memory_space<vmem>>, vector<64x16xbf16>
    "tpu.trace_start"() <{level = 10 : i32, message = "btk,kn->btn"}> : () -> ()
    %cst_40 = arith.constant dense<0.000000e+00> : vector<2x8x16xf32>
    %84 = tpu.matmul %82, %83, %cst_40 {dimension_numbers = #tpu.dot_dimension_numbers<[2], [0], [0, 1], [1], [0, 0, 0, 1, 1, 1], [], []>} : vector<2x8x64xbf16>, vector<64x16xbf16>, vector<2x8x16xf32> -> vector<2x8x16xf32>
    "tpu.trace_stop"() : () -> ()
    %c0_41 = arith.constant 0 : index
    %c0_42 = arith.constant 0 : index
    %85 = vector.load %arg14[%c0_41, %c0_42] : memref<1x16xf32, #tpu.memory_space<vmem>>, vector<1x16xf32>
    %86 = vector.shape_cast %85 : vector<1x16xf32> to vector<1x1x16xf32>
    %87 = vector.broadcast %86 : vector<1x1x16xf32> to vector<2x8x16xf32>
    %88 = arith.addf %84, %87 : vector<2x8x16xf32>
    %89 = tpu.concatenate %88, %88, %88, %88 in 2 : vector<2x8x16xf32>, vector<2x8x16xf32>, vector<2x8x16xf32>, vector<2x8x16xf32> -> vector<2x8x64xf32>
    %c0_43 = arith.constant 0 : index
    %c0_44 = arith.constant 0 : index
    %c0_45 = arith.constant 0 : index
    %90 = vector.load %arg16[%c0_43, %c0_44, %c0_45] : memref<2x8x64xf32, #tpu.memory_space<vmem>>, vector<2x8x64xf32>
    tpu.vector_store %arg16[%c0_43, %c0_44, %c0_45], %89 {strides = array<i32>} : memref<2x8x64xf32, #tpu.memory_space<vmem>>, vector<2x8x64xf32>,
    %91 = vector.extract_strided_slice %8 {offsets = [0, 0, 0], sizes = [2, 8, 8], strides = [1, 1, 1]} : vector<2x8x10xf32> to vector<2x8x8xf32>
    %92 = vector.extract_strided_slice %8 {offsets = [0, 0, 8], sizes = [2, 8, 1], strides = [1, 1, 1]} : vector<2x8x10xf32> to vector<2x8x1xf32>
    %93 = vector.extract_strided_slice %8 {offsets = [0, 0, 9], sizes = [2, 8, 1], strides = [1, 1, 1]} : vector<2x8x10xf32> to vector<2x8x1xf32>
    %cst_46 = arith.constant dense<0xFF800000> : vector<2x8xf32>
    %94 = vector.multi_reduction <maximumf>, %91, %cst_46 [2] : vector<2x8x8xf32> to vector<2x8xf32>
    %95 = vector.shape_cast %94 : vector<2x8xf32> to vector<2x8x1xf32>
    %96 = vector.broadcast %95 : vector<2x8x1xf32> to vector<2x8x8xf32>
    %97 = arith.subf %91, %96 : vector<2x8x8xf32>
    %98 = math.exp %97 : vector<2x8x8xf32>
    %cst_47 = arith.constant dense<0.000000e+00> : vector<2x8xf32>
    %99 = vector.multi_reduction <add>, %98, %cst_47 [2] : vector<2x8x8xf32> to vector<2x8xf32>
    %100 = vector.shape_cast %99 : vector<2x8xf32> to vector<2x8x1xf32>
    %101 = math.log %100 : vector<2x8x1xf32>
    %102 = vector.broadcast %101 : vector<2x8x1xf32> to vector<2x8x8xf32>
    %103 = arith.subf %97, %102 : vector<2x8x8xf32>
    %104 = vector.extract_strided_slice %14 {offsets = [0, 0, 1], sizes = [2, 8, 8], strides = [1, 1, 1]} : vector<2x8x9xi1> to vector<2x8x8xi1>
    %cst_48 = arith.constant 0.000000e+00 : f32
    %105 = vector.broadcast %cst_48 : f32 to vector<2x8x8xf32>
    %106 = arith.select %104, %103, %105 : vector<2x8x8xi1>, vector<2x8x8xf32>
    %cst_49 = arith.constant dense<0.000000e+00> : vector<2x8xf32>
    %107 = vector.multi_reduction <add>, %106, %cst_49 [2] : vector<2x8x8xf32> to vector<2x8xf32>
    %108 = vector.shape_cast %107 : vector<2x8xf32> to vector<2x8x1xf32>
    %cst_50 = arith.constant 0.000000e+00 : f32
    %109 = vector.broadcast %cst_50 : f32 to vector<2x8x1xf32>
    %110 = arith.subf %109, %108 : vector<2x8x1xf32>
    %cst_51 = arith.constant dense<0.000000e+00> : vector<2x8xf32>
    %111 = vector.multi_reduction <add>, %103, %cst_51 [2] : vector<2x8x8xf32> to vector<2x8xf32>
    %112 = vector.shape_cast %111 : vector<2x8xf32> to vector<2x8x1xf32>
    %cst_52 = arith.constant 0.000000e+00 : f32
    %113 = vector.broadcast %cst_52 : f32 to vector<2x8x1xf32>
    %114 = arith.subf %113, %112 : vector<2x8x1xf32>
    %cst_53 = arith.constant 8.000000e+00 : f32
    %115 = vector.broadcast %cst_53 : f32 to vector<2x8x1xf32>
    %116 = arith.divf %114, %115 : vector<2x8x1xf32>
    %cst_54 = arith.constant 0.899999976 : f32
    %117 = vector.broadcast %cst_54 : f32 to vector<2x8x1xf32>
    %118 = arith.mulf %117, %110 : vector<2x8x1xf32>
    %cst_55 = arith.constant 1.000000e-01 : f32
    %119 = vector.broadcast %cst_55 : f32 to vector<2x8x1xf32>
    %120 = arith.mulf %119, %116 : vector<2x8x1xf32>
    %121 = arith.addf %118, %120 : vector<2x8x1xf32>
    %c0_i32 = arith.constant 0 : i32
    %122 = vector.broadcast %c0_i32 : i32 to vector<2x8x1xi32>
    %123 = arith.cmpi ne, %11, %122 : vector<2x8x1xi32>
    %124 = arith.extui %123 : vector<2x8x1xi1> to vector<2x8x1xi32>
    %125 = arith.sitofp %124 : vector<2x8x1xi32> to vector<2x8x1xf32>
    %126 = vector.shape_cast %125 : vector<2x8x1xf32> to vector<1x2x8x1xf32>
    %cst_56 = arith.constant dense<0.000000e+00> : vector<1xf32>
    %127 = vector.multi_reduction <add>, %126, %cst_56 [1, 2, 3] : vector<1x2x8x1xf32> to vector<1xf32>
    %128 = vector.shape_cast %127 : vector<1xf32> to vector<1x1x1x1xf32>
    %129 = vector.extract %128[0, 0, 0, 0] : f32 from vector<1x1x1x1xf32>
    %cst_57 = arith.constant 1.000000e+00 : f32
    %130 = arith.maximumf %129, %cst_57 : f32
    %131 = arith.mulf %121, %125 : vector<2x8x1xf32>
    %132 = vector.shape_cast %131 : vector<2x8x1xf32> to vector<1x2x8x1xf32>
    %cst_58 = arith.constant dense<0.000000e+00> : vector<1xf32>
    %133 = vector.multi_reduction <add>, %132, %cst_58 [1, 2, 3] : vector<1x2x8x1xf32> to vector<1xf32>
    %134 = vector.shape_cast %133 : vector<1xf32> to vector<1x1x1x1xf32>
    %135 = vector.extract %134[0, 0, 0, 0] : f32 from vector<1x1x1x1xf32>
    %136 = arith.divf %135, %130 : f32
    %137 = arith.subf %92, %26 : vector<2x8x1xf32>
    %138 = math.absf %137 : vector<2x8x1xf32>
    %139 = vector.shape_cast %138 : vector<2x8x1xf32> to vector<1x2x8x1xf32>
    %cst_59 = arith.constant dense<0.000000e+00> : vector<1xf32>
    %140 = vector.multi_reduction <add>, %139, %cst_59 [1, 2, 3] : vector<1x2x8x1xf32> to vector<1xf32>
    %141 = vector.shape_cast %140 : vector<1xf32> to vector<1x1x1x1xf32>
    %142 = vector.extract %141[0, 0, 0, 0] : f32 from vector<1x1x1x1xf32>
    %cst_60 = arith.constant 1.600000e+01 : f32
    %143 = arith.divf %142, %cst_60 : f32
    %144 = arith.subf %93, %57 : vector<2x8x1xf32>
    %145 = math.absf %144 : vector<2x8x1xf32>
    %146 = vector.shape_cast %145 : vector<2x8x1xf32> to vector<1x2x8x1xf32>
    %cst_61 = arith.constant dense<0.000000e+00> : vector<1xf32>
    %147 = vector.multi_reduction <add>, %146, %cst_61 [1, 2, 3] : vector<1x2x8x1xf32> to vector<1xf32>
    %148 = vector.shape_cast %147 : vector<1xf32> to vector<1x1x1x1xf32>
    %149 = vector.extract %148[0, 0, 0, 0] : f32 from vector<1x1x1x1xf32>
    %cst_62 = arith.constant 1.600000e+01 : f32
    %150 = arith.divf %149, %cst_62 : f32
    %c0_63 = arith.constant 0 : index
    %c0_64 = arith.constant 0 : index
    %c0_65 = arith.constant 0 : index
    %c0_66 = arith.constant 0 : index
    %151 = vector.load %arg4[%c0_63, %c0_64, %c0_65, %c0_66] : memref<2x16x8x4xf32, #tpu.memory_space<vmem>>, vector<2x16x8x4xf32>
    %152 = tpu.transpose %88, [0, 2, 1] : vector<2x8x16xf32> -> vector<2x16x8xf32>
    %153 = vector.shape_cast %152 : vector<2x16x8xf32> to vector<2x16x8x1xf32>
    %154 = vector.broadcast %153 : vector<2x16x8x1xf32> to vector<2x16x8x4xf32>
    %155 = arith.subf %154, %151 : vector<2x16x8x4xf32>
    %156 = math.absf %155 : vector<2x16x8x4xf32>
    %157 = vector.shape_cast %156 : vector<2x16x8x4xf32> to vector<1x2x16x8x4xf32>
    %cst_67 = arith.constant dense<0.000000e+00> : vector<1xf32>
    %158 = vector.multi_reduction <add>, %157, %cst_67 [1, 2, 3, 4] : vector<1x2x16x8x4xf32> to vector<1xf32>
    %159 = vector.shape_cast %158 : vector<1xf32> to vector<1x1x1x1x1xf32>
    %160 = vector.extract %159[0, 0, 0, 0, 0] : f32 from vector<1x1x1x1x1xf32>
    %cst_68 = arith.constant 1.024000e+03 : f32
    %161 = arith.divf %160, %cst_68 : f32
    %c0_69 = arith.constant 0 : index
    %c0_70 = arith.constant 0 : index
    %162 = vector.load %arg5[%c0_69, %c0_70] : memref<2x8xf32, #tpu.memory_space<vmem>>, vector<2x8xf32>
    %163 = vector.shape_cast %162 : vector<2x8xf32> to vector<2x1x8x1xf32>
    %164 = vector.broadcast %163 : vector<2x1x8x1xf32> to vector<2x16x8x4xf32>
    %165 = arith.mulf %151, %164 : vector<2x16x8x4xf32>
    %166 = vector.shape_cast %162 : vector<2x8xf32> to vector<1x2x8xf32>
    %cst_71 = arith.constant dense<0.000000e+00> : vector<1xf32>
    %167 = vector.multi_reduction <add>, %166, %cst_71 [1, 2] : vector<1x2x8xf32> to vector<1xf32>
    %168 = vector.shape_cast %167 : vector<1xf32> to vector<1x1x1xf32>
    %169 = vector.extract %168[0, 0, 0] : f32 from vector<1x1x1xf32>
    %cst_72 = arith.constant 6.400000e+01 : f32
    %170 = arith.mulf %cst_72, %169 : f32
    %171 = vector.broadcast %153 : vector<2x16x8x1xf32> to vector<2x16x8x4xf32>
    %172 = arith.subf %165, %171 : vector<2x16x8x4xf32>
    %173 = arith.mulf %172, %172 : vector<2x16x8x4xf32>
    %174 = vector.shape_cast %173 : vector<2x16x8x4xf32> to vector<1x2x16x8x4xf32>
    %cst_73 = arith.constant dense<0.000000e+00> : vector<1xf32>
    %175 = vector.multi_reduction <add>, %174, %cst_73 [1, 2, 3, 4] : vector<1x2x16x8x4xf32> to vector<1xf32>
    %176 = vector.shape_cast %175 : vector<1xf32> to vector<1x1x1x1x1xf32>
    %177 = vector.extract %176[0, 0, 0, 0, 0] : f32 from vector<1x1x1x1x1xf32>
    %cst_74 = arith.constant 5.000000e-01 : f32
    %178 = arith.mulf %cst_74, %177 : f32
    %179 = arith.divf %178, %170 : f32
    %cst_75 = arith.constant 0.918938517 : f32
    %180 = arith.addf %179, %cst_75 : f32
    %c0_76 = arith.constant 0 : index
    %c0_77 = arith.constant 0 : index
    %181 = memref.load %arg17[%c0_76, %c0_77] : memref<1x6xf32, #tpu.memory_space<smem>>
    memref.store %136, %arg17[%c0_76, %c0_77] : memref<1x6xf32, #tpu.memory_space<smem>>
    %c0_78 = arith.constant 0 : index
    %c1_79 = arith.constant 1 : index
    %182 = memref.load %arg17[%c0_78, %c1_79] : memref<1x6xf32, #tpu.memory_space<smem>>
    memref.store %143, %arg17[%c0_78, %c1_79] : memref<1x6xf32, #tpu.memory_space<smem>>
    %c0_80 = arith.constant 0 : index
    %c2_81 = arith.constant 2 : index
    %183 = memref.load %arg17[%c0_80, %c2_81] : memref<1x6xf32, #tpu.memory_space<smem>>
    memref.store %150, %arg17[%c0_80, %c2_81] : memref<1x6xf32, #tpu.memory_space<smem>>
    %184 = arith.addf %136, %143 : f32
    %185 = arith.addf %184, %150 : f32
    %c0_82 = arith.constant 0 : index
    %c3 = arith.constant 3 : index
    %186 = memref.load %arg17[%c0_82, %c3] : memref<1x6xf32, #tpu.memory_space<smem>>
    memref.store %185, %arg17[%c0_82, %c3] : memref<1x6xf32, #tpu.memory_space<smem>>
    %c0_83 = arith.constant 0 : index
    %c4 = arith.constant 4 : index
    %187 = memref.load %arg17[%c0_83, %c4] : memref<1x6xf32, #tpu.memory_space<smem>>
    memref.store %161, %arg17[%c0_83, %c4] : memref<1x6xf32, #tpu.memory_space<smem>>
    %c0_84 = arith.constant 0 : index
    %c5 = arith.constant 5 : index
    %188 = memref.load %arg17[%c0_84, %c5] : memref<1x6xf32, #tpu.memory_space<smem>>
    memref.store %180, %arg17[%c0_84, %c5] : memref<1x6xf32, #tpu.memory_space<smem>>
    return
  }
}

</mosaic_0001>

<llo_original>
// kernel: _lambda_.1
$region0: #{_lambda_.1}
  #allocation0 [shape = 'u32[]', space=smem, size = 0x4, offset = 0x4, fixed_abs, tag = 'smem constant byte address 0x4 - core index']
  #allocation1 [shape = 'u32[72,128]{1,0:T(1,128)}', space=vmem, size = 0x9000, scoped, tag = 'internal scratch']
  %s0 = inlined_call_operand.vmem [shape: bf16[2,8,16], index: 0, kind: input, shape index: {}]
  %s1 = inlined_call_operand.vmem [shape: s32[2,8], index: 1, kind: input, shape index: {}]
  %s2 = inlined_call_operand.vmem [shape: f32[3,2,8], index: 2, kind: input, shape index: {}]
  %s3 = inlined_call_operand.vmem [shape: f32[3,2,8], index: 3, kind: input, shape index: {}]
  %s4 = inlined_call_operand.vmem [shape: f32[2,16,8,4], index: 4, kind: input, shape index: {}]
  %s5 = inlined_call_operand.vmem [shape: f32[2,8], index: 5, kind: input, shape index: {}]
  %s6 = inlined_call_operand.vmem [shape: bf16[16,42], index: 6, kind: input, shape index: {}]
  %s7 = inlined_call_operand.vmem [shape: f32[1,42], index: 7, kind: input, shape index: {}]
  %s8 = inlined_call_operand.vmem [shape: f32[9,16], index: 8, kind: input, shape index: {}]
  %s9 = inlined_call_operand.vmem [shape: f32[3,8], index: 9, kind: input, shape index: {}]
  %s10 = inlined_call_operand.vmem [shape: f32[1,8], index: 10, kind: input, shape index: {}]
  %s11 = inlined_call_operand.vmem [shape: f32[3,8], index: 11, kind: input, shape index: {}]
  %s12 = inlined_call_operand.vmem [shape: f32[1,8], index: 12, kind: input, shape index: {}]
  %s13 = inlined_call_operand.vmem [shape: bf16[64,16], index: 13, kind: input, shape index: {}]
  %s14 = inlined_call_operand.vmem [shape: f32[1,16], index: 14, kind: input, shape index: {}]
  %s15 = inlined_call_operand.vmem [shape: f32[2,8,10], index: 15, kind: output, shape index: {0}]
  %s16 = inlined_call_operand.vmem [shape: f32[2,8,64], index: 16, kind: output, shape index: {1}]
  %s17 = inlined_call_operand.vmem [shape: f32[1,6], index: 17, kind: output, shape index: {2}]
  %18 = xla_tuple %s15, %s16, %s17
  %s19 = sld [smem:[#allocation0]]
  $region86: #{_lambda_.1} parent=0
    _
  %s21 = ssub.s32 1, %s19
  %s22 = scalar_select 0, %s21, %s19
  $region1: #{_lambda_.1} parent=0
    #allocation2 [shape = 'u8[512]{0}', space=smem, size = 0x200, scoped, tag = 'output window, operand 2, single buffered']
    #allocation3 [shape = 's32[1]{0}', space=sflag, size = 0x4, scoped, tag = 'scoped memory for _lambda_.1']
    %23 = vsyncpa [#allocation3], 0
    // Predicated region
    $region2: #{_lambda_.1} parent=1 // pred_check
      _
    $region3: #{_lambda_.1} parent=1 // pred_check_branch
      %25 = sbr.rel (0) target = $region5
    $region4: #{_lambda_.1} parent=1 // pred_region
      _
    $region5: #{_lambda_.1} parent=1 // pred_fallthru
      _
    // Predicated region
    $region6: #{_lambda_.1} parent=1 // pred_check
      _
    $region7: #{_lambda_.1} parent=1 // pred_check_branch
      %27 = sbr.rel (0) target = $region9
    $region8: #{_lambda_.1} parent=1 // pred_region
      _
    $region9: #{_lambda_.1} parent=1 // pred_fallthru
      _
    // Predicated region
    $region10: #{_lambda_.1} parent=1 // pred_check
      _
    $region11: #{_lambda_.1} parent=1 // pred_check_branch
      %29 = sbr.rel (0) target = $region13
    $region12: #{_lambda_.1} parent=1 // pred_region
      _
    $region13: #{_lambda_.1} parent=1 // pred_fallthru
      _
    // Predicated region
    $region14: #{_lambda_.1} parent=1 // pred_check
      _
    $region15: #{_lambda_.1} parent=1 // pred_check_branch
      %31 = sbr.rel (0) target = $region17
    $region16: #{_lambda_.1} parent=1 // pred_region
      _
    $region17: #{_lambda_.1} parent=1 // pred_fallthru
      _
    // Predicated region
    $region18: #{_lambda_.1} parent=1 // pred_check
      _
    $region19: #{_lambda_.1} parent=1 // pred_check_branch
      %33 = sbr.rel (0) target = $region21
    $region20: #{_lambda_.1} parent=1 // pred_region
      _
    $region21: #{_lambda_.1} parent=1 // pred_fallthru
      _
    // Predicated region
    $region22: #{_lambda_.1} parent=1 // pred_check
      _
    $region23: #{_lambda_.1} parent=1 // pred_check_branch
      %35 = sbr.rel (0) target = $region25
    $region24: #{_lambda_.1} parent=1 // pred_region
      _
    $region25: #{_lambda_.1} parent=1 // pred_fallthru
      _
    // Predicated region
    $region26: #{_lambda_.1} parent=1 // pred_check
      _
    $region27: #{_lambda_.1} parent=1 // pred_check_branch
      %37 = sbr.rel (0) target = $region29
    $region28: #{_lambda_.1} parent=1 // pred_region
      _
    $region29: #{_lambda_.1} parent=1 // pred_fallthru
      _
    // Predicated region
    $region30: #{_lambda_.1} parent=1 // pred_check
      _
    $region31: #{_lambda_.1} parent=1 // pred_check_branch
      %39 = sbr.rel (0) target = $region33
    $region32: #{_lambda_.1} parent=1 // pred_region
      _
    $region33: #{_lambda_.1} parent=1 // pred_fallthru
      _
    // Predicated region
    $region34: #{_lambda_.1} parent=1 // pred_check
      _
    $region35: #{_lambda_.1} parent=1 // pred_check_branch
      %41 = sbr.rel (0) target = $region37
    $region36: #{_lambda_.1} parent=1 // pred_region
      _
    $region37: #{_lambda_.1} parent=1 // pred_fallthru
      _
    // Predicated region
    $region38: #{_lambda_.1} parent=1 // pred_check
      _
    $region39: #{_lambda_.1} parent=1 // pred_check_branch
      %43 = sbr.rel (0) target = $region41
    $region40: #{_lambda_.1} parent=1 // pred_region
      _
    $region41: #{_lambda_.1} parent=1 // pred_fallthru
      _
    // Predicated region
    $region42: #{_lambda_.1} parent=1 // pred_check
      _
    $region43: #{_lambda_.1} parent=1 // pred_check_branch
      %45 = sbr.rel (0) target = $region45
    $region44: #{_lambda_.1} parent=1 // pred_region
      _
    $region45: #{_lambda_.1} parent=1 // pred_fallthru
      _
    // Predicated region
    $region46: #{_lambda_.1} parent=1 // pred_check
      _
    $region47: #{_lambda_.1} parent=1 // pred_check_branch
      %47 = sbr.rel (0) target = $region49
    $region48: #{_lambda_.1} parent=1 // pred_region
      _
    $region49: #{_lambda_.1} parent=1 // pred_fallthru
      _
    // Predicated region
    $region50: #{_lambda_.1} parent=1 // pred_check
      _
    $region51: #{_lambda_.1} parent=1 // pred_check_branch
      %49 = sbr.rel (0) target = $region53
    $region52: #{_lambda_.1} parent=1 // pred_region
      _
    $region53: #{_lambda_.1} parent=1 // pred_fallthru
      _
    // Predicated region
    $region54: #{_lambda_.1} parent=1 // pred_check
      _
    $region55: #{_lambda_.1} parent=1 // pred_check_branch
      %51 = sbr.rel (0) target = $region57
    $region56: #{_lambda_.1} parent=1 // pred_region
      _
    $region57: #{_lambda_.1} parent=1 // pred_fallthru
      _
    // Predicated region
    $region58: #{_lambda_.1} parent=1 // pred_check
      _
    $region59: #{_lambda_.1} parent=1 // pred_check_branch
      %53 = sbr.rel (0) target = $region61
    $region60: #{_lambda_.1} parent=1 // pred_region
      _
    $region61: #{_lambda_.1} parent=1 // pred_fallthru
      _
    %v55 = vld [vmem:[%s0] sm:$0xf]
    %v56 = vld [vmem:[%s0 + $0x4] sm:$0xf]
    %v57 = vld [vmem:[%s6] sm:$0xf]
    %v58 = vld [vmem:[%s6 + $0x4] sm:$0xf]
    %v59 = vld [vmem:[%s7] sm:$0x1]
    %v61 = vperm.slane %v59, 0
    %v65 = vunpack.c.l.b16 %v55
    %v66 = vunpack.c.l.b16 %v56
    %v67 = vpack.c.b16 %v66, %v65
    %v70 = vunpack.c.l.b16 %v57
    %v71 = vunpack.c.l.b16 %v58
    %v72 = vpack.c.b16 %v71, %v70
    %vm74 = vcmask 130048
    %v76 = vsel %vm74, %v67, 0
    %78 = vmatpush.bf16.msra.mxu0 0
    %79 = vmatpush.bf16.msra.mxu0 0
    %80 = vmatpush.bf16.msra.mxu0 0
    %81 = vmatpush.bf16.msra.mxu0 0
    %82 = vmatpush.bf16.msra.mxu0 0
    %83 = vmatpush.bf16.msra.mxu0 0
    %84 = vmatpush.bf16.msra.mxu0 0
    %85 = vmatpush.bf16.msra.mxu0 %v72
    %86 = vmatmul.bf16.gmra.mxu0 %v76
    %v87 = vpop.f32.mrf.mxu0
    %v88 = vadd.f32 %v61, %v87
    %v89 = vpop.f32.mrf.mxu0
    %v90 = vadd.f32 %v61, %v89
    %91 = vdwg.mxu0
    %94 = vrot.lane.b32.xlu0 %v88, 96
    %v95 = vpop.permute.xlu0 %94
    %96 = vrot.lane.b32.xlu0 %v90, 96
    %v97 = vpop.permute.xlu0 %96
    %vm100 = vcmask 80896
    %101 = vst.msk [vmem:[%s15] sm:$0xff] %vm100, %v95
    %102 = vst.msk [vmem:[%s15 + $0x8] sm:$0xff] %vm100, %v97
    %v103 = vld [vmem:[%s1] sm:$0x3]
    %v104 = vperm.slane %v103, 0
    %v105 = vlaneseq
    %v106 = vshrl.u32 %v105, 7
    %108 = vset.pattern.permute.xlu0 %v106
    %109 = vperm.xlu0 %108, %v104
    %v110 = vpop.permute.xlu0 %109
    %v111 = vperm.slane %v103, 1
    %v112 = vlaneseq
    %v113 = vshrl.u32 %v112, 7
    %115 = vset.pattern.permute.xlu0 %v113
    %116 = vperm.xlu0 %115, %v111
    %v117 = vpop.permute.xlu0 %116
    %v118 = vlaneseq
    %v119 = vand.u32 %v118, 127
    %vm120 = vcmp.eq.s32.totalorder %v119, %v110
    %vm121 = vcmp.eq.s32.totalorder %v119, %v117
    %v122 = vsel %vm120, 1, 0
    %v123 = vsel %vm121, 1, 0
    %v124 = vcvt.s32.f32 %v122
    %v125 = vcvt.s32.f32 %v123
    %v126 = vld [vmem:[%s8] sm:$0xff]
    %v127 = vld [vmem:[%s8 + $0x8] sm:$0x1]
    %vm128 = vcmask 72704
    %v130 = vsel %vm128, %v124, 0
    %v133 = vsel %vm128, %v125, 0
    %vm135 = vcmask 1040384
    %v137 = vsel %vm135, %v127, 0
    %139 = vmatpush.msra.mxu0 0.0
    %140 = vmatpush.msra.mxu0 0.0
    %141 = vmatpush.msra.mxu0 0.0
    %142 = vmatpush.msra.mxu0 0.0
    %143 = vmatpush.msra.mxu0 0.0
    %144 = vmatpush.msra.mxu0 0.0
    %145 = vmatpush.msra.mxu0 0.0
    %146 = vmatpush.msra.mxu0 0.0
    %147 = vmatpush.msra.mxu0 0.0
    %148 = vmatpush.msra.mxu0 0.0
    %149 = vmatpush.msra.mxu0 0.0
    %150 = vmatpush.msra.mxu0 0.0
    %151 = vmatpush.msra.mxu0 0.0
    %152 = vmatpush.msra.mxu0 0.0
    %153 = vmatpush.msra.mxu0 %v137
    %154 = vmatpush.msra.mxu0 %v126
    %155 = vmatmul.f32.gmra.mxu0 %v130
    %v156 = vpop.f32.mrf.mxu0
    %v157 = vadd.f32 0.0, %v156
    %158 = vmatmul.f32.gmra.mxu0 %v133
    %v159 = vpop.f32.mrf.mxu0
    %v160 = vadd.f32 0.0, %v159
    %161 = vdwg.mxu0
    %v162 = vld [vmem:[%s9] sm:$0x7]
    %v163 = vld [vmem:[%s10] sm:$0x1]
    %v164 = vld [vmem:[%s2] sm:$0x3]
    %v165 = vperm.slane %v164, 0
    %v166 = vlaneseq
    %v167 = vshrl.u32 %v166, 7
    %169 = vset.pattern.permute.xlu0 %v167
    %170 = vperm.xlu0 %169, %v165
    %v171 = vpop.permute.xlu0 %170
    %v172 = vperm.slane %v164, 1
    %v173 = vlaneseq
    %v174 = vshrl.u32 %v173, 7
    %176 = vset.pattern.permute.xlu0 %v174
    %177 = vperm.xlu0 %176, %v172
    %v178 = vpop.permute.xlu0 %177
    %s179 = scalar_lea.vmem %s2, 2
    %v180 = vld [vmem:[%s179] sm:$0x3]
    %v181 = vperm.slane %v180, 0
    %v182 = vlaneseq
    %v183 = vshrl.u32 %v182, 7
    %185 = vset.pattern.permute.xlu0 %v183
    %186 = vperm.xlu0 %185, %v181
    %v187 = vpop.permute.xlu0 %186
    %v188 = vperm.slane %v180, 1
    %v189 = vlaneseq
    %v190 = vshrl.u32 %v189, 7
    %192 = vset.pattern.permute.xlu0 %v190
    %193 = vperm.xlu0 %192, %v188
    %v194 = vpop.permute.xlu0 %193
    %s195 = scalar_lea.vmem %s2, 4
    %v196 = vld [vmem:[%s195] sm:$0x3]
    %v197 = vperm.slane %v196, 0
    %v198 = vlaneseq
    %v199 = vshrl.u32 %v198, 7
    %201 = vset.pattern.permute.xlu0 %v199
    %202 = vperm.xlu0 %201, %v197
    %v203 = vpop.permute.xlu0 %202
    %v204 = vperm.slane %v196, 1
    %v205 = vlaneseq
    %v206 = vshrl.u32 %v205, 7
    %208 = vset.pattern.permute.xlu0 %v206
    %209 = vperm.xlu0 %208, %v204
    %v210 = vpop.permute.xlu0 %209
    %v211 = vperm.slane %v162, 0
    %v212 = vmul.f32 %v171, %v211
    %v213 = vmul.f32 %v178, %v211
    %v214 = vperm.slane %v162, 1
    %v215 = vmul.f32 %v187, %v214
    %v216 = vmul.f32 %v194, %v214
    %v217 = vadd.f32 %v212, %v215
    %v218 = vadd.f32 %v213, %v216
    %v219 = vperm.slane %v162, 2
    %v220 = vmul.f32 %v203, %v219
    %v221 = vmul.f32 %v210, %v219
    %v222 = vadd.f32 %v217, %v220
    %v223 = vadd.f32 %v218, %v221
    %v225 = vperm.slane %v163, 0
    %v227 = vadd.f32 %v222, %v225
    %v228 = vadd.f32 %v223, %v225
    %v229 = vld [vmem:[%s11] sm:$0x7]
    %v230 = vld [vmem:[%s12] sm:$0x1]
    %v231 = vld [vmem:[%s3] sm:$0x3]
    %v232 = vperm.slane %v231, 0
    %v233 = vlaneseq
    %v234 = vshrl.u32 %v233, 7
    %236 = vset.pattern.permute.xlu0 %v234
    %237 = vperm.xlu0 %236, %v232
    %v238 = vpop.permute.xlu0 %237
    %v239 = vperm.slane %v231, 1
    %v240 = vlaneseq
    %v241 = vshrl.u32 %v240, 7
    %243 = vset.pattern.permute.xlu0 %v241
    %244 = vperm.xlu0 %243, %v239
    %v245 = vpop.permute.xlu0 %244
    %s246 = scalar_lea.vmem %s3, 2
    %v247 = vld [vmem:[%s246] sm:$0x3]
    %v248 = vperm.slane %v247, 0
    %v249 = vlaneseq
    %v250 = vshrl.u32 %v249, 7
    %252 = vset.pattern.permute.xlu0 %v250
    %253 = vperm.xlu0 %252, %v248
    %v254 = vpop.permute.xlu0 %253
    %v255 = vperm.slane %v247, 1
    %v256 = vlaneseq
    %v257 = vshrl.u32 %v256, 7
    %259 = vset.pattern.permute.xlu0 %v257
    %260 = vperm.xlu0 %259, %v255
    %v261 = vpop.permute.xlu0 %260
    %s262 = scalar_lea.vmem %s3, 4
    %v263 = vld [vmem:[%s262] sm:$0x3]
    %v264 = vperm.slane %v263, 0
    %v265 = vlaneseq
    %v266 = vshrl.u32 %v265, 7
    %268 = vset.pattern.permute.xlu0 %v266
    %269 = vperm.xlu0 %268, %v264
    %v270 = vpop.permute.xlu0 %269
    %v271 = vperm.slane %v263, 1
    %v272 = vlaneseq
    %v273 = vshrl.u32 %v272, 7
    %275 = vset.pattern.permute.xlu0 %v273
    %276 = vperm.xlu0 %275, %v271
    %v277 = vpop.permute.xlu0 %276
    %v278 = vperm.slane %v229, 0
    %v279 = vmul.f32 %v238, %v278
    %v280 = vmul.f32 %v245, %v278
    %v281 = vperm.slane %v229, 1
    %v282 = vmul.f32 %v254, %v281
    %v283 = vmul.f32 %v261, %v281
    %v284 = vadd.f32 %v279, %v282
    %v285 = vadd.f32 %v280, %v283
    %v286 = vperm.slane %v229, 2
    %v287 = vmul.f32 %v270, %v286
    %v288 = vmul.f32 %v277, %v286
    %v289 = vadd.f32 %v284, %v287
    %v290 = vadd.f32 %v285, %v288
    %v292 = vperm.slane %v230, 0
    %v294 = vadd.f32 %v289, %v292
    %v295 = vadd.f32 %v290, %v292
    %298 = vrot.lane.b32.xlu0 %v157, 32
    %v299 = vpop.permute.xlu0 %298
    %300 = vrot.lane.b32.xlu0 %v160, 32
    %v301 = vpop.permute.xlu0 %300
    %306 = vrot.lane.b32.xlu0 %v227, 48
    %v307 = vpop.permute.xlu0 %306
    %308 = vrot.lane.b32.xlu0 %v228, 48
    %v309 = vpop.permute.xlu0 %308
    %314 = vrot.lane.b32.xlu0 %v294, 56
    %v315 = vpop.permute.xlu0 %314
    %316 = vrot.lane.b32.xlu0 %v295, 56
    %v317 = vpop.permute.xlu0 %316
    %vm320 = vcmask 261120
    %v321 = vsel %vm320, %v88, %v299
    %v322 = vsel %vm320, %v90, %v301
    %vm323 = vcmask 392192
    %v324 = vsel %vm323, %v321, %v307
    %v325 = vsel %vm323, %v322, %v309
    %vm326 = vcmask 457728
    %v327 = vsel %vm326, %v324, %v315
    %v328 = vsel %vm326, %v325, %v317
    %v329 = vpack.c.bf16 %v327, %v327
    %v330 = vpack.c.bf16 %v328, %v328
    %v331 = vld [vmem:[%s13] sm:$0xf]
    %v332 = vld [vmem:[%s13 + $0x4] sm:$0xf]
    %v333 = vld [vmem:[%s13 + $0x8] sm:$0xf]
    %v334 = vld [vmem:[%s13 + $0xc] sm:$0xf]
    %v335 = vld [vmem:[%s13 + $0x10] sm:$0xf]
    %v336 = vld [vmem:[%s13 + $0x14] sm:$0xf]
    %v337 = vld [vmem:[%s13 + $0x18] sm:$0xf]
    %v338 = vld [vmem:[%s13 + $0x1c] sm:$0xf]
    %v339 = vld [vmem:[%s14] sm:$0x1]
    %v341 = vperm.slane %v339, 0
    %v345 = vunpack.c.l.b16 %v329
    %v346 = vunpack.c.l.b16 %v330
    %v347 = vpack.c.b16 %v346, %v345
    %v356 = vunpack.c.l.b16 %v331
    %v357 = vunpack.c.l.b16 %v332
    %v358 = vunpack.c.l.b16 %v333
    %v359 = vunpack.c.l.b16 %v334
    %v360 = vunpack.c.l.b16 %v335
    %v361 = vunpack.c.l.b16 %v336
    %v362 = vunpack.c.l.b16 %v337
    %v363 = vunpack.c.l.b16 %v338
    %v364 = vpack.c.b16 %v357, %v356
    %v365 = vpack.c.b16 %v359, %v358
    %v366 = vpack.c.b16 %v361, %v360
    %v367 = vpack.c.b16 %v363, %v362
    %vm372 = vcmask 523264
    %v374 = vsel %vm372, %v347, 0
    %376 = vmatpush.bf16.msra.mxu0 0
    %377 = vmatpush.bf16.msra.mxu0 0
    %378 = vmatpush.bf16.msra.mxu0 0
    %379 = vmatpush.bf16.msra.mxu0 0
    %380 = vmatpush.bf16.msra.mxu0 %v367
    %381 = vmatpush.bf16.msra.mxu0 %v366
    %382 = vmatpush.bf16.msra.mxu0 %v365
    %383 = vmatpush.bf16.msra.mxu0 %v364
    %384 = vmatmul.bf16.gmra.mxu0 %v374
    %v385 = vpop.f32.mrf.mxu0
    %v386 = vadd.f32 %v341, %v385
    %v387 = vpop.f32.mrf.mxu0
    %v388 = vadd.f32 %v341, %v387
    %389 = vdwg.mxu0
    %392 = vrot.lane.b32.xlu0 %v386, 16
    %v393 = vpop.permute.xlu0 %392
    %394 = vrot.lane.b32.xlu0 %v388, 16
    %v395 = vpop.permute.xlu0 %394
    %398 = vrot.lane.b32.xlu0 %v386, 32
    %v399 = vpop.permute.xlu0 %398
    %400 = vrot.lane.b32.xlu0 %v388, 32
    %v401 = vpop.permute.xlu0 %400
    %404 = vrot.lane.b32.xlu0 %v386, 48
    %v405 = vpop.permute.xlu0 %404
    %406 = vrot.lane.b32.xlu0 %v388, 48
    %v407 = vpop.permute.xlu0 %406
    %v410 = vsel %vm74, %v386, %v393
    %v411 = vsel %vm74, %v388, %v395
    %v412 = vsel %vm320, %v410, %v399
    %v413 = vsel %vm320, %v411, %v401
    %v414 = vsel %vm323, %v412, %v405
    %v415 = vsel %vm323, %v413, %v407
    %416 = vst.msk [vmem:[%s16] sm:$0xff] %vm372, %v414
    %417 = vst.msk [vmem:[%s16 + $0x8] sm:$0xff] %vm372, %v415
    %vm418 = vcmask 326912
    %v419 = vsel %vm418, %v88, -inf
    %420 = vmax.xlane.f32.xlu0 %v419
    %v421 = vpop.xlane.xlu0 %420
    %v422 = vsel %vm418, %v90, -inf
    %423 = vmax.xlane.f32.xlu0 %v422
    %v424 = vpop.xlane.xlu0 %423
    %v425 = vsub.f32 %v88, %v421
    %v426 = vsub.f32 %v90, %v424
    %v427 = vmul.f32 %v425, 1.442695
    %v428 = vpow.pop %v427
    %v429 = vmul.f32 %v426, 1.442695
    %v430 = vpow.pop %v429
    %433 = vrot.lane.b32.xlu0 %v428, 96
    %v434 = vpop.permute.xlu0 %433
    %435 = vrot.lane.b32.xlu0 %v430, 96
    %v436 = vpop.permute.xlu0 %435
    %vm439 = vcmask 64512
    %v440 = vsel %vm439, %v434, 0.0
    %441 = vadd.xlane.f32.xlu0 %v440
    %v442 = vpop.xlane.xlu0 %441
    %v443 = vsel %vm439, %v436, 0.0
    %444 = vadd.xlane.f32.xlu0 %v443
    %v445 = vpop.xlane.xlu0 %444
    %v446 = vlog2.pop %v442
    %v447 = vmul.f32 %v446, 0.6931472
    %v448 = vlog2.pop %v445
    %v449 = vmul.f32 %v448, 0.6931472
    %v450 = vsub.f32 %v425, %v447
    %v451 = vsub.f32 %v426, %v449
    %454 = vrot.lane.b32.xlu0 %v450, 97
    %v455 = vpop.permute.xlu0 %454
    %456 = vrot.lane.b32.xlu0 %v451, 97
    %v457 = vpop.permute.xlu0 %456
    %v460 = vsel %vm120, %v455, 0.0
    %v461 = vsel %vm121, %v457, 0.0
    %464 = vrot.lane.b32.xlu0 %v460, 127
    %v465 = vpop.permute.xlu0 %464
    %466 = vrot.lane.b32.xlu0 %v461, 127
    %v467 = vpop.permute.xlu0 %466
    %v470 = vsel %vm439, %v465, 0.0
    %471 = vadd.xlane.f32.xlu0 %v470
    %v472 = vpop.xlane.xlu0 %471
    %v473 = vsel %vm439, %v467, 0.0
    %474 = vadd.xlane.f32.xlu0 %v473
    %v475 = vpop.xlane.xlu0 %474
    %v476 = vsub.f32 0.0, %v472
    %v477 = vsub.f32 0.0, %v475
    %478 = vrot.lane.b32.xlu0 %v450, 96
    %v479 = vpop.permute.xlu0 %478
    %480 = vrot.lane.b32.xlu0 %v451, 96
    %v481 = vpop.permute.xlu0 %480
    %v484 = vsel %vm439, %v479, 0.0
    %485 = vadd.xlane.f32.xlu0 %v484
    %v486 = vpop.xlane.xlu0 %485
    %v487 = vsel %vm439, %v481, 0.0
    %488 = vadd.xlane.f32.xlu0 %v487
    %v489 = vpop.xlane.xlu0 %488
    %v490 = vsub.f32 0.0, %v486
    %v491 = vsub.f32 0.0, %v489
    %v492 = vrcp.pop 8.0
    %v493 = vmul.f32 8.0, %v492
    %v494 = vsub.f32 1.0, %v493
    %v495 = vmul.f32 %v492, %v494
    %v496 = vadd.f32 %v492, %v495
    %vm497 = vweird.f32 %v492
    %v498 = vsel %vm497, %v492, %v496
    %v499 = vmul.f32 %v490, %v498
    %v500 = vmul.f32 %v491, %v498
    %v501 = vmul.f32 %v476, 0.9
    %v502 = vmul.f32 %v477, 0.9
    %v503 = vmul.f32 %v499, 0.1
    %v504 = vmul.f32 %v500, 0.1
    %v505 = vadd.f32 %v501, %v503
    %v506 = vadd.f32 %v502, %v504
    %vm507 = vcmp.ne.s32.totalorder %v110, 0
    %vm508 = vcmp.ne.s32.totalorder %v117, 0
    %v509 = vsel %vm507, 1, 0
    %v510 = vsel %vm508, 1, 0
    %v511 = vcvt.s32.f32 %v509
    %v512 = vcvt.s32.f32 %v510
    %vm513 = vcmask 7168
    %v514 = vsel %vm513, %v511, 0.0
    %v515 = vsel %vm513, %v512, 0.0
    %v516 = vadd.f32 %v514, %v515
    %517 = vadd.xlane.f32.xlu0 %v516
    %v518 = vpop.xlane.xlu0 %517
    %v519 = vrot.slane %v518, 4
    %v520 = vadd.f32 %v518, %v519
    %v521 = vrot.slane %v520, 2
    %v522 = vadd.f32 %v520, %v521
    %v523 = vrot.slane %v522, 1
    %v524 = vadd.f32 %v522, %v523
    %s525 = vtos %v524
    %s526 = smax.f32 %s525, 1.0
    %v527 = vmul.f32 %v505, %v511
    %v528 = vmul.f32 %v506, %v512
    %v529 = vsel %vm513, %v527, 0.0
    %v530 = vsel %vm513, %v528, 0.0
    %v531 = vadd.f32 %v529, %v530
    %532 = vadd.xlane.f32.xlu0 %v531
    %v533 = vpop.xlane.xlu0 %532
    %v534 = vrot.slane %v533, 4
    %v535 = vadd.f32 %v533, %v534
    %v536 = vrot.slane %v535, 2
    %v537 = vadd.f32 %v535, %v536
    %v538 = vrot.slane %v537, 1
    %v539 = vadd.f32 %v537, %v538
    %s540 = vtos %v539
    %v541 = vstv %s526
    %v542 = vrcp.pop %v541
    %v543 = vmul.f32 %v541, %v542
    %v544 = vsub.f32 1.0, %v543
    %v545 = vmul.f32 %v542, %v544
    %v546 = vadd.f32 %v542, %v545
    %vm547 = vweird.f32 %v541
    %vm548 = vweird.f32 %v542
    %vm549 = vmor %vm547, %vm548
    %v550 = vsel %vm549, %v542, %v546
    %v551 = vand.u32 2147483647, %v541
    %vm552 = vcmp.eq.f32.partialorder %v551, 8.507059e+37
    %v553 = vand.u32 %v541, 2147483648
    %v554 = vor.u32 1.1754944e-38, %v553
    %v555 = vsel %vm552, %v554, %v550
    %s556 = vtos %v555
    %s557 = smul.f32 %s540, %s556
    %v558 = vsub.f32 %v88, %v187
    %v559 = vsub.f32 %v90, %v194
    %v560 = vand.u32 2147483647, %v558
    %v561 = vand.u32 2147483647, %v559
    %564 = vrot.lane.b32.xlu0 %v560, 88
    %v565 = vpop.permute.xlu0 %564
    %566 = vrot.lane.b32.xlu0 %v561, 88
    %v567 = vpop.permute.xlu0 %566
    %v570 = vsel %vm513, %v565, 0.0
    %v571 = vsel %vm513, %v567, 0.0
    %v572 = vadd.f32 %v570, %v571
    %573 = vadd.xlane.f32.xlu0 %v572
    %v574 = vpop.xlane.xlu0 %573
    %v575 = vrot.slane %v574, 4
    %v576 = vadd.f32 %v574, %v575
    %v577 = vrot.slane %v576, 2
    %v578 = vadd.f32 %v576, %v577
    %v579 = vrot.slane %v578, 1
    %v580 = vadd.f32 %v578, %v579
    %s581 = vtos %v580
    %v582 = vrcp.pop 16.0
    %v583 = vmul.f32 16.0, %v582
    %v584 = vsub.f32 1.0, %v583
    %v585 = vmul.f32 %v582, %v584
    %v586 = vadd.f32 %v582, %v585
    %vm587 = vweird.f32 %v582
    %v588 = vsel %vm587, %v582, %v586
    %s589 = vtos %v588
    %s590 = smul.f32 %s581, %s589
    %v591 = vsub.f32 %v88, %v254
    %v592 = vsub.f32 %v90, %v261
    %v593 = vand.u32 2147483647, %v591
    %v594 = vand.u32 2147483647, %v592
    %597 = vrot.lane.b32.xlu0 %v593, 87
    %v598 = vpop.permute.xlu0 %597
    %599 = vrot.lane.b32.xlu0 %v594, 87
    %v600 = vpop.permute.xlu0 %599
    %v603 = vsel %vm513, %v598, 0.0
    %v604 = vsel %vm513, %v600, 0.0
    %v605 = vadd.f32 %v603, %v604
    %606 = vadd.xlane.f32.xlu0 %v605
    %v607 = vpop.xlane.xlu0 %606
    %v608 = vrot.slane %v607, 4
    %v609 = vadd.f32 %v607, %v608
    %v610 = vrot.slane %v609, 2
    %v611 = vadd.f32 %v609, %v610
    %v612 = vrot.slane %v611, 1
    %v613 = vadd.f32 %v611, %v612
    %s614 = vtos %v613
    %v615 = vrcp.pop 16.0
    %v616 = vmul.f32 16.0, %v615
    %v617 = vsub.f32 1.0, %v616
    %v618 = vmul.f32 %v615, %v617
    %v619 = vadd.f32 %v615, %v618
    %vm620 = vweird.f32 %v615
    %v621 = vsel %vm620, %v615, %v619
    %s622 = vtos %v621
    %s623 = smul.f32 %s614, %s622
    %v624 = vld [vmem:[%s4] sm:$0xff]
    %v625 = vld [vmem:[%s4 + $0x8] sm:$0xff]
    %v626 = vld [vmem:[%s4 + $0x10] sm:$0xff]
    %v627 = vld [vmem:[%s4 + $0x18] sm:$0xff]
    %v628 = vld [vmem:[%s4 + $0x20] sm:$0xff]
    %v629 = vld [vmem:[%s4 + $0x28] sm:$0xff]
    %v630 = vld [vmem:[%s4 + $0x30] sm:$0xff]
    %v631 = vld [vmem:[%s4 + $0x38] sm:$0xff]
    %v632 = vld [vmem:[%s4 + $0x40] sm:$0xff]
    %v633 = vld [vmem:[%s4 + $0x48] sm:$0xff]
    %v634 = vld [vmem:[%s4 + $0x50] sm:$0xff]
    %v635 = vld [vmem:[%s4 + $0x58] sm:$0xff]
    %v636 = vld [vmem:[%s4 + $0x60] sm:$0xff]
    %v637 = vld [vmem:[%s4 + $0x68] sm:$0xff]
    %v638 = vld [vmem:[%s4 + $0x70] sm:$0xff]
    %v639 = vld [vmem:[%s4 + $0x78] sm:$0xff]
    %v640 = vld [vmem:[%s4 + $0x80] sm:$0xff]
    %v641 = vld [vmem:[%s4 + $0x88] sm:$0xff]
    %v642 = vld [vmem:[%s4 + $0x90] sm:$0xff]
    %v643 = vld [vmem:[%s4 + $0x98] sm:$0xff]
    %v644 = vld [vmem:[%s4 + $0xa0] sm:$0xff]
    %v645 = vld [vmem:[%s4 + $0xa8] sm:$0xff]
    %v646 = vld [vmem:[%s4 + $0xb0] sm:$0xff]
    %v647 = vld [vmem:[%s4 + $0xb8] sm:$0xff]
    %v648 = vld [vmem:[%s4 + $0xc0] sm:$0xff]
    %v649 = vld [vmem:[%s4 + $0xc8] sm:$0xff]
    %v650 = vld [vmem:[%s4 + $0xd0] sm:$0xff]
    %v651 = vld [vmem:[%s4 + $0xd8] sm:$0xff]
    %v652 = vld [vmem:[%s4 + $0xe0] sm:$0xff]
    %v653 = vld [vmem:[%s4 + $0xe8] sm:$0xff]
    %v654 = vld [vmem:[%s4 + $0xf0] sm:$0xff]
    %v655 = vld [vmem:[%s4 + $0xf8] sm:$0xff]
    %656 = vxpose.xlu0.b32.start [1/16] %v386, 128
    %657 = vxpose.xlu0.b32.cont [2/16] 0.0, 128
    %658 = vxpose.xlu0.b32.cont [3/16] 0.0, 128
    %659 = vxpose.xlu0.b32.cont [4/16] 0.0, 128
    %660 = vxpose.xlu0.b32.cont [5/16] 0.0, 128
    %661 = vxpose.xlu0.b32.cont [6/16] 0.0, 128
    %662 = vxpose.xlu0.b32.cont [7/16] 0.0, 128
    %663 = vxpose.xlu0.b32.cont [8/16] 0.0, 128
    %664 = vxpose.xlu0.b32.cont [9/16] 0.0, 128
    %665 = vxpose.xlu0.b32.cont [10/16] 0.0, 128
    %666 = vxpose.xlu0.b32.cont [11/16] 0.0, 128
    %667 = vxpose.xlu0.b32.cont [12/16] 0.0, 128
    %668 = vxpose.xlu0.b32.cont [13/16] 0.0, 128
    %669 = vxpose.xlu0.b32.cont [14/16] 0.0, 128
    %670 = vxpose.xlu0.b32.cont [15/16] 0.0, 128
    %671 = vxpose.xlu0.b32.end [16/16] 0.0, 128
    %v672 = vpop.trf.xlu0
    %v673 = vpop.trf.xlu0
    %v674 = vpop.trf.xlu0
    %v675 = vpop.trf.xlu0
    %v676 = vpop.trf.xlu0
    %v677 = vpop.trf.xlu0
    %v678 = vpop.trf.xlu0
    %v679 = vpop.trf.xlu0
    %v680 = vpop.trf.xlu0
    %v681 = vpop.trf.xlu0
    %v682 = vpop.trf.xlu0
    %v683 = vpop.trf.xlu0
    %v684 = vpop.trf.xlu0
    %v685 = vpop.trf.xlu0
    %v686 = vpop.trf.xlu0
    %v687 = vpop.trf.xlu0
    %688 = vxpose.xlu0.b32.start [1/16] %v388, 128
    %689 = vxpose.xlu0.b32.cont [2/16] 0.0, 128
    %690 = vxpose.xlu0.b32.cont [3/16] 0.0, 128
    %691 = vxpose.xlu0.b32.cont [4/16] 0.0, 128
    %692 = vxpose.xlu0.b32.cont [5/16] 0.0, 128
    %693 = vxpose.xlu0.b32.cont [6/16] 0.0, 128
    %694 = vxpose.xlu0.b32.cont [7/16] 0.0, 128
    %695 = vxpose.xlu0.b32.cont [8/16] 0.0, 128
    %696 = vxpose.xlu0.b32.cont [9/16] 0.0, 128
    %697 = vxpose.xlu0.b32.cont [10/16] 0.0, 128
    %698 = vxpose.xlu0.b32.cont [11/16] 0.0, 128
    %699 = vxpose.xlu0.b32.cont [12/16] 0.0, 128
    %700 = vxpose.xlu0.b32.cont [13/16] 0.0, 128
    %701 = vxpose.xlu0.b32.cont [14/16] 0.0, 128
    %702 = vxpose.xlu0.b32.cont [15/16] 0.0, 128
    %703 = vxpose.xlu0.b32.end [16/16] 0.0, 128
    %v704 = vpop.trf.xlu0
    %v705 = vpop.trf.xlu0
    %v706 = vpop.trf.xlu0
    %v707 = vpop.trf.xlu0
    %v708 = vpop.trf.xlu0
    %v709 = vpop.trf.xlu0
    %v710 = vpop.trf.xlu0
    %v711 = vpop.trf.xlu0
    %v712 = vpop.trf.xlu0
    %v713 = vpop.trf.xlu0
    %v714 = vpop.trf.xlu0
    %v715 = vpop.trf.xlu0
    %v716 = vpop.trf.xlu0
    %v717 = vpop.trf.xlu0
    %v718 = vpop.trf.xlu0
    %v719 = vpop.trf.xlu0
    %v720 = vperm.slane %v672, 0
    %v721 = vlaneseq
    %v722 = vshrl.u32 %v721, 7
    %724 = vset.pattern.permute.xlu0 %v722
    %725 = vperm.xlu0 %724, %v720
    %v726 = vpop.permute.xlu0 %725
    %v727 = vperm.slane %v672, 1
    %v728 = vlaneseq
    %v729 = vshrl.u32 %v728, 7
    %731 = vset.pattern.permute.xlu0 %v729
    %732 = vperm.xlu0 %731, %v727
    %v733 = vpop.permute.xlu0 %732
    %v734 = vperm.slane %v672, 2
    %v735 = vlaneseq
    %v736 = vshrl.u32 %v735, 7
    %738 = vset.pattern.permute.xlu0 %v736
    %739 = vperm.xlu0 %738, %v734
    %v740 = vpop.permute.xlu0 %739
    %v741 = vperm.slane %v672, 3
    %v742 = vlaneseq
    %v743 = vshrl.u32 %v742, 7
    %745 = vset.pattern.permute.xlu0 %v743
    %746 = vperm.xlu0 %745, %v741
    %v747 = vpop.permute.xlu0 %746
    %v748 = vperm.slane %v672, 4
    %v749 = vlaneseq
    %v750 = vshrl.u32 %v749, 7
    %752 = vset.pattern.permute.xlu0 %v750
    %753 = vperm.xlu0 %752, %v748
    %v754 = vpop.permute.xlu0 %753
    %v755 = vperm.slane %v672, 5
    %v756 = vlaneseq
    %v757 = vshrl.u32 %v756, 7
    %759 = vset.pattern.permute.xlu0 %v757
    %760 = vperm.xlu0 %759, %v755
    %v761 = vpop.permute.xlu0 %760
    %v762 = vperm.slane %v672, 6
    %v763 = vlaneseq
    %v764 = vshrl.u32 %v763, 7
    %766 = vset.pattern.permute.xlu0 %v764
    %767 = vperm.xlu0 %766, %v762
    %v768 = vpop.permute.xlu0 %767
    %v769 = vperm.slane %v672, 7
    %v770 = vlaneseq
    %v771 = vshrl.u32 %v770, 7
    %773 = vset.pattern.permute.xlu0 %v771
    %774 = vperm.xlu0 %773, %v769
    %v775 = vpop.permute.xlu0 %774
    %v776 = vperm.slane %v673, 0
    %v777 = vlaneseq
    %v778 = vshrl.u32 %v777, 7
    %780 = vset.pattern.permute.xlu0 %v778
    %781 = vperm.xlu0 %780, %v776
    %v782 = vpop.permute.xlu0 %781
    %v783 = vperm.slane %v673, 1
    %v784 = vlaneseq
    %v785 = vshrl.u32 %v784, 7
    %787 = vset.pattern.permute.xlu0 %v785
    %788 = vperm.xlu0 %787, %v783
    %v789 = vpop.permute.xlu0 %788
    %v790 = vperm.slane %v673, 2
    %v791 = vlaneseq
    %v792 = vshrl.u32 %v791, 7
    %794 = vset.pattern.permute.xlu0 %v792
    %795 = vperm.xlu0 %794, %v790
    %v796 = vpop.permute.xlu0 %795
    %v797 = vperm.slane %v673, 3
    %v798 = vlaneseq
    %v799 = vshrl.u32 %v798, 7
    %801 = vset.pattern.permute.xlu0 %v799
    %802 = vperm.xlu0 %801, %v797
    %v803 = vpop.permute.xlu0 %802
    %v804 = vperm.slane %v673, 4
    %v805 = vlaneseq
    %v806 = vshrl.u32 %v805, 7
    %808 = vset.pattern.permute.xlu0 %v806
    %809 = vperm.xlu0 %808, %v804
    %v810 = vpop.permute.xlu0 %809
    %v811 = vperm.slane %v673, 5
    %v812 = vlaneseq
    %v813 = vshrl.u32 %v812, 7
    %815 = vset.pattern.permute.xlu0 %v813
    %816 = vperm.xlu0 %815, %v811
    %v817 = vpop.permute.xlu0 %816
    %v818 = vperm.slane %v673, 6
    %v819 = vlaneseq
    %v820 = vshrl.u32 %v819, 7
    %822 = vset.pattern.permute.xlu0 %v820
    %823 = vperm.xlu0 %822, %v818
    %v824 = vpop.permute.xlu0 %823
    %v825 = vperm.slane %v673, 7
    %v826 = vlaneseq
    %v827 = vshrl.u32 %v826, 7
    %829 = vset.pattern.permute.xlu0 %v827
    %830 = vperm.xlu0 %829, %v825
    %v831 = vpop.permute.xlu0 %830
    %v832 = vperm.slane %v704, 0
    %v833 = vlaneseq
    %v834 = vshrl.u32 %v833, 7
    %836 = vset.pattern.permute.xlu0 %v834
    %837 = vperm.xlu0 %836, %v832
    %v838 = vpop.permute.xlu0 %837
    %v839 = vperm.slane %v704, 1
    %v840 = vlaneseq
    %v841 = vshrl.u32 %v840, 7
    %843 = vset.pattern.permute.xlu0 %v841
    %844 = vperm.xlu0 %843, %v839
    %v845 = vpop.permute.xlu0 %844
    %v846 = vperm.slane %v704, 2
    %v847 = vlaneseq
    %v848 = vshrl.u32 %v847, 7
    %850 = vset.pattern.permute.xlu0 %v848
    %851 = vperm.xlu0 %850, %v846
    %v852 = vpop.permute.xlu0 %851
    %v853 = vperm.slane %v704, 3
    %v854 = vlaneseq
    %v855 = vshrl.u32 %v854, 7
    %857 = vset.pattern.permute.xlu0 %v855
    %858 = vperm.xlu0 %857, %v853
    %v859 = vpop.permute.xlu0 %858
    %v860 = vperm.slane %v704, 4
    %v861 = vlaneseq
    %v862 = vshrl.u32 %v861, 7
    %864 = vset.pattern.permute.xlu0 %v862
    %865 = vperm.xlu0 %864, %v860
    %v866 = vpop.permute.xlu0 %865
    %v867 = vperm.slane %v704, 5
    %v868 = vlaneseq
    %v869 = vshrl.u32 %v868, 7
    %871 = vset.pattern.permute.xlu0 %v869
    %872 = vperm.xlu0 %871, %v867
    %v873 = vpop.permute.xlu0 %872
    %v874 = vperm.slane %v704, 6
    %v875 = vlaneseq
    %v876 = vshrl.u32 %v875, 7
    %878 = vset.pattern.permute.xlu0 %v876
    %879 = vperm.xlu0 %878, %v874
    %v880 = vpop.permute.xlu0 %879
    %v881 = vperm.slane %v704, 7
    %v882 = vlaneseq
    %v883 = vshrl.u32 %v882, 7
    %885 = vset.pattern.permute.xlu0 %v883
    %886 = vperm.xlu0 %885, %v881
    %v887 = vpop.permute.xlu0 %886
    %v888 = vperm.slane %v705, 0
    %v889 = vlaneseq
    %v890 = vshrl.u32 %v889, 7
    %892 = vset.pattern.permute.xlu0 %v890
    %893 = vperm.xlu0 %892, %v888
    %v894 = vpop.permute.xlu0 %893
    %v895 = vperm.slane %v705, 1
    %v896 = vlaneseq
    %v897 = vshrl.u32 %v896, 7
    %899 = vset.pattern.permute.xlu0 %v897
    %900 = vperm.xlu0 %899, %v895
    %v901 = vpop.permute.xlu0 %900
    %v902 = vperm.slane %v705, 2
    %v903 = vlaneseq
    %v904 = vshrl.u32 %v903, 7
    %906 = vset.pattern.permute.xlu0 %v904
    %907 = vperm.xlu0 %906, %v902
    %v908 = vpop.permute.xlu0 %907
    %v909 = vperm.slane %v705, 3
    %v910 = vlaneseq
    %v911 = vshrl.u32 %v910, 7
    %913 = vset.pattern.permute.xlu0 %v911
    %914 = vperm.xlu0 %913, %v909
    %v915 = vpop.permute.xlu0 %914
    %v916 = vperm.slane %v705, 4
    %v917 = vlaneseq
    %v918 = vshrl.u32 %v917, 7
    %920 = vset.pattern.permute.xlu0 %v918
    %921 = vperm.xlu0 %920, %v916
    %v922 = vpop.permute.xlu0 %921
    %v923 = vperm.slane %v705, 5
    %v924 = vlaneseq
    %v925 = vshrl.u32 %v924, 7
    %927 = vset.pattern.permute.xlu0 %v925
    %928 = vperm.xlu0 %927, %v923
    %v929 = vpop.permute.xlu0 %928
    %v930 = vperm.slane %v705, 6
    %v931 = vlaneseq
    %v932 = vshrl.u32 %v931, 7
    %934 = vset.pattern.permute.xlu0 %v932
    %935 = vperm.xlu0 %934, %v930
    %v936 = vpop.permute.xlu0 %935
    %v937 = vperm.slane %v705, 7
    %v938 = vlaneseq
    %v939 = vshrl.u32 %v938, 7
    %941 = vset.pattern.permute.xlu0 %v939
    %942 = vperm.xlu0 %941, %v937
    %v943 = vpop.permute.xlu0 %942
    %v944 = vsub.f32 %v726, %v624
    %v945 = vsub.f32 %v733, %v625
    %v946 = vsub.f32 %v740, %v626
    %v947 = vsub.f32 %v747, %v627
    %v948 = vsub.f32 %v754, %v628
    %v949 = vsub.f32 %v761, %v629
    %v950 = vsub.f32 %v768, %v630
    %v951 = vsub.f32 %v775, %v631
    %v952 = vsub.f32 %v782, %v632
    %v953 = vsub.f32 %v789, %v633
    %v954 = vsub.f32 %v796, %v634
    %v955 = vsub.f32 %v803, %v635
    %v956 = vsub.f32 %v810, %v636
    %v957 = vsub.f32 %v817, %v637
    %v958 = vsub.f32 %v824, %v638
    %v959 = vsub.f32 %v831, %v639
    %v960 = vsub.f32 %v838, %v640
    %v961 = vsub.f32 %v845, %v641
    %v962 = vsub.f32 %v852, %v642
    %v963 = vsub.f32 %v859, %v643
    %v964 = vsub.f32 %v866, %v644
    %v965 = vsub.f32 %v873, %v645
    %v966 = vsub.f32 %v880, %v646
    %v967 = vsub.f32 %v887, %v647
    %v968 = vsub.f32 %v894, %v648
    %v969 = vsub.f32 %v901, %v649
    %v970 = vsub.f32 %v908, %v650
    %v971 = vsub.f32 %v915, %v651
    %v972 = vsub.f32 %v922, %v652
    %v973 = vsub.f32 %v929, %v653
    %v974 = vsub.f32 %v936, %v654
    %v975 = vsub.f32 %v943, %v655
    %v976 = vand.u32 2147483647, %v944
    %v977 = vand.u32 2147483647, %v945
    %v978 = vand.u32 2147483647, %v946
    %v979 = vand.u32 2147483647, %v947
    %v980 = vand.u32 2147483647, %v948
    %v981 = vand.u32 2147483647, %v949
    %v982 = vand.u32 2147483647, %v950
    %v983 = vand.u32 2147483647, %v951
    %v984 = vand.u32 2147483647, %v952
    %v985 = vand.u32 2147483647, %v953
    %v986 = vand.u32 2147483647, %v954
    %v987 = vand.u32 2147483647, %v955
    %v988 = vand.u32 2147483647, %v956
    %v989 = vand.u32 2147483647, %v957
    %v990 = vand.u32 2147483647, %v958
    %v991 = vand.u32 2147483647, %v959
    %v992 = vand.u32 2147483647, %v960
    %v993 = vand.u32 2147483647, %v961
    %v994 = vand.u32 2147483647, %v962
    %v995 = vand.u32 2147483647, %v963
    %v996 = vand.u32 2147483647, %v964
    %v997 = vand.u32 2147483647, %v965
    %v998 = vand.u32 2147483647, %v966
    %v999 = vand.u32 2147483647, %v967
    %v1000 = vand.u32 2147483647, %v968
    %v1001 = vand.u32 2147483647, %v969
    %v1002 = vand.u32 2147483647, %v970
    %v1003 = vand.u32 2147483647, %v971
    %v1004 = vand.u32 2147483647, %v972
    %v1005 = vand.u32 2147483647, %v973
    %v1006 = vand.u32 2147483647, %v974
    %v1007 = vand.u32 2147483647, %v975
    %vm1008 = vcmask 31744
    %v1009 = vsel %vm1008, %v976, 0.0
    %v1010 = vsel %vm1008, %v977, 0.0
    %v1011 = vadd.f32 %v1009, %v1010
    %v1012 = vsel %vm1008, %v978, 0.0
    %v1013 = vadd.f32 %v1011, %v1012
    %v1014 = vsel %vm1008, %v979, 0.0
    %v1015 = vadd.f32 %v1013, %v1014
    %v1016 = vsel %vm1008, %v980, 0.0
    %v1017 = vadd.f32 %v1015, %v1016
    %v1018 = vsel %vm1008, %v981, 0.0
    %v1019 = vadd.f32 %v1017, %v1018
    %v1020 = vsel %vm1008, %v982, 0.0
    %v1021 = vadd.f32 %v1019, %v1020
    %v1022 = vsel %vm1008, %v983, 0.0
    %v1023 = vadd.f32 %v1021, %v1022
    %v1024 = vsel %vm1008, %v984, 0.0
    %v1025 = vadd.f32 %v1023, %v1024
    %v1026 = vsel %vm1008, %v985, 0.0
    %v1027 = vadd.f32 %v1025, %v1026
    %v1028 = vsel %vm1008, %v986, 0.0
    %v1029 = vadd.f32 %v1027, %v1028
    %v1030 = vsel %vm1008, %v987, 0.0
    %v1031 = vadd.f32 %v1029, %v1030
    %v1032 = vsel %vm1008, %v988, 0.0
    %v1033 = vadd.f32 %v1031, %v1032
    %v1034 = vsel %vm1008, %v989, 0.0
    %v1035 = vadd.f32 %v1033, %v1034
    %v1036 = vsel %vm1008, %v990, 0.0
    %v1037 = vadd.f32 %v1035, %v1036
    %v1038 = vsel %vm1008, %v991, 0.0
    %v1039 = vadd.f32 %v1037, %v1038
    %v1040 = vsel %vm1008, %v992, 0.0
    %v1041 = vadd.f32 %v1039, %v1040
    %v1042 = vsel %vm1008, %v993, 0.0
    %v1043 = vadd.f32 %v1041, %v1042
    %v1044 = vsel %vm1008, %v994, 0.0
    %v1045 = vadd.f32 %v1043, %v1044
    %v1046 = vsel %vm1008, %v995, 0.0
    %v1047 = vadd.f32 %v1045, %v1046
    %v1048 = vsel %vm1008, %v996, 0.0
    %v1049 = vadd.f32 %v1047, %v1048
    %v1050 = vsel %vm1008, %v997, 0.0
    %v1051 = vadd.f32 %v1049, %v1050
    %v1052 = vsel %vm1008, %v998, 0.0
    %v1053 = vadd.f32 %v1051, %v1052
    %v1054 = vsel %vm1008, %v999, 0.0
    %v1055 = vadd.f32 %v1053, %v1054
    %v1056 = vsel %vm1008, %v1000, 0.0
    %v1057 = vadd.f32 %v1055, %v1056
    %v1058 = vsel %vm1008, %v1001, 0.0
    %v1059 = vadd.f32 %v1057, %v1058
    %v1060 = vsel %vm1008, %v1002, 0.0
    %v1061 = vadd.f32 %v1059, %v1060
    %v1062 = vsel %vm1008, %v1003, 0.0
    %v1063 = vadd.f32 %v1061, %v1062
    %v1064 = vsel %vm1008, %v1004, 0.0
    %v1065 = vadd.f32 %v1063, %v1064
    %v1066 = vsel %vm1008, %v1005, 0.0
    %v1067 = vadd.f32 %v1065, %v1066
    %v1068 = vsel %vm1008, %v1006, 0.0
    %v1069 = vadd.f32 %v1067, %v1068
    %v1070 = vsel %vm1008, %v1007, 0.0
    %v1071 = vadd.f32 %v1069, %v1070
    %1072 = vadd.xlane.f32.xlu0 %v1071
    %v1073 = vpop.xlane.xlu0 %1072
    %v1074 = vrot.slane %v1073, 4
    %v1075 = vadd.f32 %v1073, %v1074
    %v1076 = vrot.slane %v1075, 2
    %v1077 = vadd.f32 %v1075, %v1076
    %v1078 = vrot.slane %v1077, 1
    %v1079 = vadd.f32 %v1077, %v1078
    %s1080 = vtos %v1079
    %v1081 = vrcp.pop 1024.0
    %v1082 = vmul.f32 1024.0, %v1081
    %v1083 = vsub.f32 1.0, %v1082
    %v1084 = vmul.f32 %v1081, %v1083
    %v1085 = vadd.f32 %v1081, %v1084
    %vm1086 = vweird.f32 %v1081
    %v1087 = vsel %vm1086, %v1081, %v1085
    %s1088 = vtos %v1087
    %s1089 = smul.f32 %s1080, %s1088
    %v1090 = vld [vmem:[%s5] sm:$0x3]
    %v1091 = vperm.slane %v1090, 0
    %v1092 = vlaneseq
    %v1093 = vshrl.u32 %v1092, 7
    %1095 = vset.pattern.permute.xlu0 %v1093
    %1096 = vperm.xlu0 %1095, %v1091
    %v1097 = vpop.permute.xlu0 %1096
    %v1098 = vperm.slane %v1090, 1
    %v1099 = vlaneseq
    %v1100 = vshrl.u32 %v1099, 7
    %1102 = vset.pattern.permute.xlu0 %v1100
    %1103 = vperm.xlu0 %1102, %v1098
    %v1104 = vpop.permute.xlu0 %1103
    %v1105 = vmul.f32 %v624, %v1097
    %v1106 = vmul.f32 %v625, %v1097
    %v1107 = vmul.f32 %v626, %v1097
    %v1108 = vmul.f32 %v627, %v1097
    %v1109 = vmul.f32 %v628, %v1097
    %v1110 = vmul.f32 %v629, %v1097
    %v1111 = vmul.f32 %v630, %v1097
    %v1112 = vmul.f32 %v631, %v1097
    %v1113 = vmul.f32 %v632, %v1097
    %v1114 = vmul.f32 %v633, %v1097
    %v1115 = vmul.f32 %v634, %v1097
    %v1116 = vmul.f32 %v635, %v1097
    %v1117 = vmul.f32 %v636, %v1097
    %v1118 = vmul.f32 %v637, %v1097
    %v1119 = vmul.f32 %v638, %v1097
    %v1120 = vmul.f32 %v639, %v1097
    %v1121 = vmul.f32 %v640, %v1104
    %v1122 = vmul.f32 %v641, %v1104
    %v1123 = vmul.f32 %v642, %v1104
    %v1124 = vmul.f32 %v643, %v1104
    %v1125 = vmul.f32 %v644, %v1104
    %v1126 = vmul.f32 %v645, %v1104
    %v1127 = vmul.f32 %v646, %v1104
    %v1128 = vmul.f32 %v647, %v1104
    %v1129 = vmul.f32 %v648, %v1104
    %v1130 = vmul.f32 %v649, %v1104
    %v1131 = vmul.f32 %v650, %v1104
    %v1132 = vmul.f32 %v651, %v1104
    %v1133 = vmul.f32 %v652, %v1104
    %v1134 = vmul.f32 %v653, %v1104
    %v1135 = vmul.f32 %v654, %v1104
    %v1136 = vmul.f32 %v655, %v1104
    %vm1137 = vcmask 58368
    %v1138 = vsel %vm1137, %v1090, 0.0
    %1139 = vadd.xlane.f32.xlu0 %v1138
    %v1140 = vpop.xlane.xlu0 %1139
    %v1141 = vrot.slane %v1140, 4
    %v1142 = vadd.f32 %v1140, %v1141
    %v1143 = vrot.slane %v1142, 2
    %v1144 = vadd.f32 %v1142, %v1143
    %v1145 = vrot.slane %v1144, 1
    %v1146 = vadd.f32 %v1144, %v1145
    %s1147 = vtos %v1146
    %s1148 = smul.f32 %s1147, 64.0
    %v1149 = vsub.f32 %v1105, %v726
    %v1150 = vsub.f32 %v1106, %v733
    %v1151 = vsub.f32 %v1107, %v740
    %v1152 = vsub.f32 %v1108, %v747
    %v1153 = vsub.f32 %v1109, %v754
    %v1154 = vsub.f32 %v1110, %v761
    %v1155 = vsub.f32 %v1111, %v768
    %v1156 = vsub.f32 %v1112, %v775
    %v1157 = vsub.f32 %v1113, %v782
    %v1158 = vsub.f32 %v1114, %v789
    %v1159 = vsub.f32 %v1115, %v796
    %v1160 = vsub.f32 %v1116, %v803
    %v1161 = vsub.f32 %v1117, %v810
    %v1162 = vsub.f32 %v1118, %v817
    %v1163 = vsub.f32 %v1119, %v824
    %v1164 = vsub.f32 %v1120, %v831
    %v1165 = vsub.f32 %v1121, %v838
    %v1166 = vsub.f32 %v1122, %v845
    %v1167 = vsub.f32 %v1123, %v852
    %v1168 = vsub.f32 %v1124, %v859
    %v1169 = vsub.f32 %v1125, %v866
    %v1170 = vsub.f32 %v1126, %v873
    %v1171 = vsub.f32 %v1127, %v880
    %v1172 = vsub.f32 %v1128, %v887
    %v1173 = vsub.f32 %v1129, %v894
    %v1174 = vsub.f32 %v1130, %v901
    %v1175 = vsub.f32 %v1131, %v908
    %v1176 = vsub.f32 %v1132, %v915
    %v1177 = vsub.f32 %v1133, %v922
    %v1178 = vsub.f32 %v1134, %v929
    %v1179 = vsub.f32 %v1135, %v936
    %v1180 = vsub.f32 %v1136, %v943
    %v1181 = vmul.f32 %v1149, %v1149
    %v1182 = vmul.f32 %v1150, %v1150
    %v1183 = vmul.f32 %v1151, %v1151
    %v1184 = vmul.f32 %v1152, %v1152
    %v1185 = vmul.f32 %v1153, %v1153
    %v1186 = vmul.f32 %v1154, %v1154
    %v1187 = vmul.f32 %v1155, %v1155
    %v1188 = vmul.f32 %v1156, %v1156
    %v1189 = vmul.f32 %v1157, %v1157
    %v1190 = vmul.f32 %v1158, %v1158
    %v1191 = vmul.f32 %v1159, %v1159
    %v1192 = vmul.f32 %v1160, %v1160
    %v1193 = vmul.f32 %v1161, %v1161
    %v1194 = vmul.f32 %v1162, %v1162
    %v1195 = vmul.f32 %v1163, %v1163
    %v1196 = vmul.f32 %v1164, %v1164
    %v1197 = vmul.f32 %v1165, %v1165
    %v1198 = vmul.f32 %v1166, %v1166
    %v1199 = vmul.f32 %v1167, %v1167
    %v1200 = vmul.f32 %v1168, %v1168
    %v1201 = vmul.f32 %v1169, %v1169
    %v1202 = vmul.f32 %v1170, %v1170
    %v1203 = vmul.f32 %v1171, %v1171
    %v1204 = vmul.f32 %v1172, %v1172
    %v1205 = vmul.f32 %v1173, %v1173
    %v1206 = vmul.f32 %v1174, %v1174
    %v1207 = vmul.f32 %v1175, %v1175
    %v1208 = vmul.f32 %v1176, %v1176
    %v1209 = vmul.f32 %v1177, %v1177
    %v1210 = vmul.f32 %v1178, %v1178
    %v1211 = vmul.f32 %v1179, %v1179
    %v1212 = vmul.f32 %v1180, %v1180
    %v1213 = vsel %vm1008, %v1181, 0.0
    %v1214 = vsel %vm1008, %v1182, 0.0
    %v1215 = vadd.f32 %v1213, %v1214
    %v1216 = vsel %vm1008, %v1183, 0.0
    %v1217 = vadd.f32 %v1215, %v1216
    %v1218 = vsel %vm1008, %v1184, 0.0
    %v1219 = vadd.f32 %v1217, %v1218
    %v1220 = vsel %vm1008, %v1185, 0.0
    %v1221 = vadd.f32 %v1219, %v1220
    %v1222 = vsel %vm1008, %v1186, 0.0
    %v1223 = vadd.f32 %v1221, %v1222
    %v1224 = vsel %vm1008, %v1187, 0.0
    %v1225 = vadd.f32 %v1223, %v1224
    %v1226 = vsel %vm1008, %v1188, 0.0
    %v1227 = vadd.f32 %v1225, %v1226
    %v1228 = vsel %vm1008, %v1189, 0.0
    %v1229 = vadd.f32 %v1227, %v1228
    %v1230 = vsel %vm1008, %v1190, 0.0
    %v1231 = vadd.f32 %v1229, %v1230
    %v1232 = vsel %vm1008, %v1191, 0.0
    %v1233 = vadd.f32 %v1231, %v1232
    %v1234 = vsel %vm1008, %v1192, 0.0
    %v1235 = vadd.f32 %v1233, %v1234
    %v1236 = vsel %vm1008, %v1193, 0.0
    %v1237 = vadd.f32 %v1235, %v1236
    %v1238 = vsel %vm1008, %v1194, 0.0
    %v1239 = vadd.f32 %v1237, %v1238
    %v1240 = vsel %vm1008, %v1195, 0.0
    %v1241 = vadd.f32 %v1239, %v1240
    %v1242 = vsel %vm1008, %v1196, 0.0
    %v1243 = vadd.f32 %v1241, %v1242
    %v1244 = vsel %vm1008, %v1197, 0.0
    %v1245 = vadd.f32 %v1243, %v1244
    %v1246 = vsel %vm1008, %v1198, 0.0
    %v1247 = vadd.f32 %v1245, %v1246
    %v1248 = vsel %vm1008, %v1199, 0.0
    %v1249 = vadd.f32 %v1247, %v1248
    %v1250 = vsel %vm1008, %v1200, 0.0
    %v1251 = vadd.f32 %v1249, %v1250
    %v1252 = vsel %vm1008, %v1201, 0.0
    %v1253 = vadd.f32 %v1251, %v1252
    %v1254 = vsel %vm1008, %v1202, 0.0
    %v1255 = vadd.f32 %v1253, %v1254
    %v1256 = vsel %vm1008, %v1203, 0.0
    %v1257 = vadd.f32 %v1255, %v1256
    %v1258 = vsel %vm1008, %v1204, 0.0
    %v1259 = vadd.f32 %v1257, %v1258
    %v1260 = vsel %vm1008, %v1205, 0.0
    %v1261 = vadd.f32 %v1259, %v1260
    %v1262 = vsel %vm1008, %v1206, 0.0
    %v1263 = vadd.f32 %v1261, %v1262
    %v1264 = vsel %vm1008, %v1207, 0.0
    %v1265 = vadd.f32 %v1263, %v1264
    %v1266 = vsel %vm1008, %v1208, 0.0
    %v1267 = vadd.f32 %v1265, %v1266
    %v1268 = vsel %vm1008, %v1209, 0.0
    %v1269 = vadd.f32 %v1267, %v1268
    %v1270 = vsel %vm1008, %v1210, 0.0
    %v1271 = vadd.f32 %v1269, %v1270
    %v1272 = vsel %vm1008, %v1211, 0.0
    %v1273 = vadd.f32 %v1271, %v1272
    %v1274 = vsel %vm1008, %v1212, 0.0
    %v1275 = vadd.f32 %v1273, %v1274
    %1276 = vadd.xlane.f32.xlu0 %v1275
    %v1277 = vpop.xlane.xlu0 %1276
    %v1278 = vrot.slane %v1277, 4
    %v1279 = vadd.f32 %v1277, %v1278
    %v1280 = vrot.slane %v1279, 2
    %v1281 = vadd.f32 %v1279, %v1280
    %v1282 = vrot.slane %v1281, 1
    %v1283 = vadd.f32 %v1281, %v1282
    %s1284 = vtos %v1283
    %s1285 = smul.f32 %s1284, 0.5
    %v1286 = vstv %s1148
    %v1287 = vrcp.pop %v1286
    %v1288 = vmul.f32 %v1286, %v1287
    %v1289 = vsub.f32 1.0, %v1288
    %v1290 = vmul.f32 %v1287, %v1289
    %v1291 = vadd.f32 %v1287, %v1290
    %vm1292 = vweird.f32 %v1286
    %vm1293 = vweird.f32 %v1287
    %vm1294 = vmor %vm1292, %vm1293
    %v1295 = vsel %vm1294, %v1287, %v1291
    %v1296 = vand.u32 2147483647, %v1286
    %vm1297 = vcmp.eq.f32.partialorder %v1296, 8.507059e+37
    %v1298 = vand.u32 %v1286, 2147483648
    %v1299 = vor.u32 1.1754944e-38, %v1298
    %v1300 = vsel %vm1297, %v1299, %v1295
    %s1301 = vtos %v1300
    %s1302 = smul.f32 %s1285, %s1301
    %s1303 = sadd.f32 %s1302, 0.9189385
    %s1304 = scalar_lea.smem [#allocation2], 0
    %1305 = sst [smem:[%s1304]] %s557
    %s1306 = scalar_lea.smem [#allocation2], 1
    %1307 = sst [smem:[%s1306]] %s590
    %s1308 = scalar_lea.smem [#allocation2], 2
    %1309 = sst [smem:[%s1308]] %s623
    %s1310 = sadd.f32 %s557, %s590
    %s1311 = sadd.f32 %s1310, %s623
    %s1312 = scalar_lea.smem [#allocation2], 3
    %1313 = sst [smem:[%s1312]] %s1311
    %s1314 = scalar_lea.smem [#allocation2], 4
    %1315 = sst [smem:[%s1314]] %s1089
    %s1316 = scalar_lea.smem [#allocation2], 5
    %1317 = sst [smem:[%s1316]] %s1303
    // Predicated region
    $region62: #{_lambda_.1} parent=1 // pred_check
      _
    $region63: #{_lambda_.1} parent=1 // pred_check_branch
      %1319 = sbr.rel (0) target = $region65
    $region64: #{_lambda_.1} parent=1 // pred_region
      _
    $region65: #{_lambda_.1} parent=1 // pred_fallthru
      _
    // Predicated region
    $region66: #{_lambda_.1} parent=1 // pred_check
      _
    $region67: #{_lambda_.1} parent=1 // pred_check_branch
      %1321 = sbr.rel (0) target = $region69
    $region68: #{_lambda_.1} parent=1 // pred_region
      _
    $region69: #{_lambda_.1} parent=1 // pred_fallthru
      _
    // Predicated region
    $region70: #{_lambda_.1} parent=1 // pred_check
      _
    $region71: #{_lambda_.1} parent=1 // pred_check_branch
      %1323 = sbr.rel (0) target = $region73
    $region72: #{_lambda_.1} parent=1 // pred_region
      %1325 = vsyncadd [#allocation3], 0
      %s1327 = sshll.u32 %s17, 4
      %s1328 = int_to_ptr.vmem [resolvable:$true] %s1327
      %1330 = dma.smem_to_vmem [#allocation2], 16, %s1328, [#allocation3]
    $region73: #{_lambda_.1} parent=1 // pred_fallthru
      _
    // Predicated region
    $region74: #{_lambda_.1} parent=1 // pred_check
      _
    $region75: #{_lambda_.1} parent=1 // pred_check_branch
      %1332 = sbr.rel (0) target = $region77
    $region76: #{_lambda_.1} parent=1 // pred_region
      _
    $region77: #{_lambda_.1} parent=1 // pred_fallthru
      _
    // Predicated region
    $region78: #{_lambda_.1} parent=1 // pred_check
      _
    $region79: #{_lambda_.1} parent=1 // pred_check_branch
      %1334 = sbr.rel (0) target = $region81
    $region80: #{_lambda_.1} parent=1 // pred_region
      _
    $region81: #{_lambda_.1} parent=1 // pred_fallthru
      _
    // Predicated region
    $region82: #{_lambda_.1} parent=1 // pred_check
      _
    $region83: #{_lambda_.1} parent=1 // pred_check_branch
      %1336 = sbr.rel (0) target = $region85
    $region84: #{_lambda_.1} parent=1 // pred_region
      %1338 = dma.done [#allocation3], 16
    $region85: #{_lambda_.1} parent=1 // pred_fallthru
      _
    %1339 = sfence
    %1340 = vsyncpa [#allocation3], 1

</llo_original>
